<compile_context>
chip_gen: v7x
topology: tpu7x:2x2x1
jax: 0.10.0
libtpu: 0.0.40
codegen_flags: <defaults>
</compile_context>

<pallas_src>
import jax
import jax.numpy as jnp
from jax.experimental import pallas as pl
from jax.experimental.pallas import tpu as pltpu

BN_EPS = 1e-5


# ----------------------------- fused kernel ---------------------------------
def _encdec_pallas(xflat, fp, *, B, T, P, past_t, n_inp):
    """Single fused kernel: encoder conv+BN+ReLU -> decoder conv+BN+ReLU -> regressor."""
    TB = T * B
    Kx = n_inp * P
    TP = T * P
    C_enc = fp["enc_w"].shape[1]
    F_out = fp["lin_wf"].shape[1]

    def kernel(x_ref, enc_w_ref, dec_w_ref, lin_w_ref, lin_b_ref, out_ref, zbuf_ref):
        # ---- Encoder: causal (past_t, n_points) conv as past_t shifted row-slice
        #      matmuls over the time-major padded input (im2col fused in-kernel).
        #      Conv bias omitted: it cancels exactly in the per-channel BN mean.
        y = jnp.dot(x_ref[0:TB, :], enc_w_ref[0:Kx, :],
                    preferred_element_type=jnp.float32)
        for dt in range(1, past_t):                                    # static unroll
            y = y + jnp.dot(x_ref[dt * B:dt * B + TB, :],
                            enc_w_ref[dt * Kx:(dt + 1) * Kx, :],
                            preferred_element_type=jnp.float32)        # (TB, C_enc)

        # ---- Encoder BN (train mode, identity affine) + ReLU, one-pass stats ----
        inv_m = 1.0 / TB                                               # N*H*W = B*t_inp*1
        mu = jnp.sum(y, axis=0, keepdims=True) * inv_m                 # (1, C_enc)
        var = jnp.sum(y * y, axis=0, keepdims=True) * inv_m - mu * mu
        y = jnp.maximum((y - mu) * jax.lax.rsqrt(var + BN_EPS), 0.0)

        # ---- Decoder 1x1 conv: kron(w, I_P) zero-padded to T*P lanes -------------
        #      zbuf[t*B+b, :P] holds the conv output; lanes [P, T*P) are exact zeros.
        zbuf_ref[...] = jnp.dot(y, dec_w_ref[...],
                                preferred_element_type=jnp.float32)    # (TB, T*P)

        # ---- Relayout t-major (TB, P) -> lane-dense b-major (B, T*P) -------------
        #      Lane-roll each time block to offset t*P and sum; the zero padding
        #      means no masking is needed.  XLU + VPU work, off the MXU path.
        flat = zbuf_ref[0:B, :]
        for t in range(1, T):                                          # static unroll
            flat = flat + pltpu.roll(zbuf_ref[t * B:(t + 1) * B, :],
                                     shift=t * P, axis=1)              # (B, T*P)

        # ---- Decoder BN (global stats) + ReLU on the lane-dense activation -------
        #      Decoder conv bias omitted: cancels in the global BN mean.
        inv_n = 1.0 / (TB * P)                                         # N*H*W = B*t_inp*n_points
        s1 = jnp.sum(jnp.sum(flat, axis=1, keepdims=True),
                     axis=0, keepdims=True) * inv_n                    # (1, 1)
        s2 = jnp.sum(jnp.sum(flat * flat, axis=1, keepdims=True),
                     axis=0, keepdims=True) * inv_n
        a = jnp.maximum((flat - s1) * jax.lax.rsqrt(s2 - s1 * s1 + BN_EPS), 0.0)

        # ---- Regressor: ONE K=T*P matmul, lane-dense (B, F_out) output -----------
        out_ref[...] = jnp.dot(a, lin_w_ref[...],
                               preferred_element_type=jnp.float32) + lin_b_ref[...]

    # No grid: single invocation, whole arrays resident in VMEM (<1 MiB), no
    # pipeline prologue/epilogue.
    # TODO(synk): for large B / F_out add a leading "parallel" grid axis (uses the
    # second TensorCore on v7x) and tile enc_w/lin_wf against the VMEM budget.
    return pl.pallas_call(
        kernel,
        out_shape=jax.ShapeDtypeStruct((B, F_out), jnp.float32),
        scratch_shapes=[pltpu.VMEM((TB, TP), jnp.float32)],
    )(xflat, fp["enc_w"], fp["dec_w"], fp["lin_wf"], fp["lin_b"])


# ----------------------------- parameter folding ----------------------------
def fold_params(params, cfg):
    """One-time parameter prep: dt-major conv weight, lane-padded kron decoder
    weight, permutation-folded regressor weight.  BN-cancelled biases dropped."""
    T, P, Hd = cfg["t_inp"], cfg["n_points"], cfg["hidden_dim"]
    n_inp, past_t = cfg["n_inp"], cfg["past_t"]
    C_enc = Hd * P
    # Encoder weight reordered dt-major so the kernel's shifted-slice matmuls take
    # contiguous row blocks: row = dt*(n_inp*P) + ci*P + p.
    enc_w = (params["enc_w"].reshape(n_inp, past_t, P, C_enc)
             .transpose(1, 0, 2, 3).reshape(past_t * n_inp * P, C_enc))
    # Decoder 1x1 conv (hidden_dim -> 1) as kron(w, I_P): contracts hidden_dim while
    # keeping n_points on lanes; zero-pad to T*P lanes so the in-kernel roll-based
    # relayout needs no masks.
    dec_s = jnp.kron(params["dec_conv_w"].reshape(Hd, 1),
                     jnp.eye(P, dtype=jnp.float32))                    # (Hd*P, P)
    dec_w = jnp.pad(dec_s, ((0, 0), (0, T * P - P)))                   # (Hd*P, T*P)
    # Fold PyTorch's view/flatten permutation into the regressor weight rows:
    # kernel flat column t*P + p  <->  torch flat index p*T + t.
    r = jnp.arange(T * P)
    perm = (r % P) * T + (r // P)
    lin_wf = params["lin_w"][perm, :]                                  # (T*P, F_out)
    return {"enc_w": enc_w, "dec_w": dec_w, "lin_wf": lin_wf, "lin_b": params["lin_b"]}


# ----------------------------- forward wrapper -------------------------------
def encdec_forward(x, folded, cfg):
    """x: (B, n_inp, t_inp, n_points) float32."""
    B, n_inp, T, P = x.shape
    past_t = cfg["past_t"]
    assert T == cfg["t_inp"] and P == cfg["n_points"]
    # TODO(synk): generalize the folded decoder/regressor path to n_out > 1
    # (module default is n_out=1).
    assert cfg["n_out"] == 1
    # Causal zero-pad on time + time-major flatten (row = t*B + b, col = ci*P + p).
    # The im2col itself (the past_t overlap) happens inside the kernel.
    xp = jnp.pad(x, ((0, 0), (0, 0), (past_t - 1, 0), (0, 0)))
    xflat = xp.transpose(2, 0, 1, 3).reshape((T + past_t - 1) * B, n_inp * P)
    out = _encdec_pallas(xflat, folded, B=B, T=T, P=P, past_t=past_t, n_inp=n_inp)
    return out.reshape(B, cfg["n_quantiles"], cfg["n_out"], cfg["t_out"], cfg["n_points"])


# ----------------------------- pure-JAX reference ----------------------------
def encdec_reference(x, params, cfg):
    B, n_inp, T, P = x.shape
    past_t, Hd = cfg["past_t"], cfg["hidden_dim"]
    C_enc = Hd * P
    # ---- Encoder ----
    xp = jnp.pad(x, ((0, 0), (0, 0), (past_t - 1, 0), (0, 0)))
    W4 = params["enc_w"].T.reshape(C_enc, n_inp, past_t, P)            # (C_out, C_in, kH, kW)
    xw = jnp.stack([xp[:, :, dt:dt + T, :] for dt in range(past_t)], axis=2)  # (B,ci,dt,T,P)
    z = jnp.einsum("bcdtp,ocdp->bot", xw, W4) + params["enc_b"].reshape(1, C_enc, 1)
    z = z[..., None]                                                   # (B, C_enc, T, 1)  NCHW
    mu = jnp.mean(z, axis=(0, 2, 3), keepdims=True)
    var = jnp.mean((z - mu) ** 2, axis=(0, 2, 3), keepdims=True)
    z = jnp.maximum((z - mu) * jax.lax.rsqrt(var + BN_EPS), 0.0)
    v = z.reshape(B, Hd, T, P)                                         # torch .view
    # ---- Decoder ----
    c = jnp.einsum("bhtp,h->btp", v, params["dec_conv_w"]) + params["dec_conv_b"][0, 0]
    c = c[:, None, :, :]                                               # (B, 1, T, P)
    mu2 = jnp.mean(c, axis=(0, 2, 3), keepdims=True)
    var2 = jnp.mean((c - mu2) ** 2, axis=(0, 2, 3), keepdims=True)
    rlu = jnp.maximum((c - mu2) * jax.lax.rsqrt(var2 + BN_EPS), 0.0)
    flat = rlu.reshape(B, cfg["n_out"] * T * P)
    out = flat @ params["lin_w"] + params["lin_b"]
    return out.reshape(B, cfg["n_quantiles"], cfg["n_out"], cfg["t_out"], cfg["n_points"])


# ----------------------------- main ------------------------------------------
if __name__ == "__main__":
    cfg = dict(t_inp=8, t_out=8, n_points=16, n_quantiles=4,
               n_inp=1, n_out=1, past_t=3, hidden_dim=32)
    B = 2
    K_enc = cfg["n_inp"] * cfg["past_t"] * cfg["n_points"]                        # 48
    C_enc = cfg["hidden_dim"] * cfg["n_points"]                                   # 512
    F_in = cfg["t_inp"] * cfg["n_points"] * cfg["n_out"]                          # 128
    F_out = cfg["n_quantiles"] * cfg["t_out"] * cfg["n_points"] * cfg["n_out"]    # 512

    key = jax.random.PRNGKey(0)
    k1, k2, k3, k4, k5, k6, kx = jax.random.split(key, 7)
    params = {
        # Encoder Conv2d weight (C_enc, n_inp, past_t, n_points) stored as (K_enc, C_enc)
        "enc_w": 0.1 * jax.random.normal(k1, (K_enc, C_enc), jnp.float32),
        "enc_b": 0.1 * jax.random.normal(k2, (1, C_enc), jnp.float32),
        # Decoder Conv2d(hidden_dim, 1, 1x1) weight stored as (hidden_dim,)
        "dec_conv_w": 0.1 * jax.random.normal(k3, (cfg["hidden_dim"],), jnp.float32),
        "dec_conv_b": 0.1 * jax.random.normal(k4, (1, 1), jnp.float32),
        # Regressor Linear weight (F_out, F_in) stored transposed as (F_in, F_out)
        "lin_w": 0.05 * jax.random.normal(k5, (F_in, F_out), jnp.float32),
        "lin_b": 0.05 * jax.random.normal(k6, (1, F_out), jnp.float32),
    }
    x = jax.random.normal(kx, (B, cfg["n_inp"], cfg["t_inp"], cfg["n_points"]), jnp.float32)

    folded = fold_params(params, cfg)                 # one-time parameter prep
    fwd = jax.jit(lambda xx, fp: encdec_forward(xx, fp, cfg))
    out = jax.block_until_ready(fwd(x, folded))

    assert out.shape == (B, cfg["n_quantiles"], cfg["n_out"], cfg["t_out"], cfg["n_points"])
    ref = encdec_reference(x, params, cfg)
    assert jnp.allclose(out, ref, atol=2e-4, rtol=2e-4), \
        f"mismatch vs pure-JAX reference; max abs err = {jnp.max(jnp.abs(out - ref))}"

    print("KERNEL_OK")
</pallas_src>

<mosaic_0001>
module attributes {stable_mosaic.version = 11 : i64} {
  func.func @kernel(%arg0: memref<20x16xf32, #tpu.memory_space<vmem>>, %arg1: memref<48x512xf32, #tpu.memory_space<vmem>>, %arg2: memref<512x128xf32, #tpu.memory_space<vmem>>, %arg3: memref<128x512xf32, #tpu.memory_space<vmem>>, %arg4: memref<1x512xf32, #tpu.memory_space<vmem>>, %arg5: memref<2x512xf32, #tpu.memory_space<vmem>>, %arg6: memref<16x128xf32, #tpu.memory_space<vmem>>) attributes {dimension_semantics = [], scalar_prefetch = 0 : i64, scratch_operands = 1 : i64, tpu.core_type = #tpu.core_type<tc>} {
    %c0 = arith.constant 0 : index
    %c0_0 = arith.constant 0 : index
    %0 = vector.load %arg0[%c0, %c0_0] : memref<20x16xf32, #tpu.memory_space<vmem>>, vector<16x16xf32>
    %c0_1 = arith.constant 0 : index
    %c0_2 = arith.constant 0 : index
    %1 = vector.load %arg1[%c0_1, %c0_2] : memref<48x512xf32, #tpu.memory_space<vmem>>, vector<16x512xf32>
    %cst = arith.constant dense<0.000000e+00> : vector<16x512xf32>
    %2 = tpu.matmul %0, %1, %cst {dimension_numbers = #tpu.dot_dimension_numbers<[1], [0], [0], [1], [0, 0, 1, 1], [], []>} : vector<16x16xf32>, vector<16x512xf32>, vector<16x512xf32> -> vector<16x512xf32>
    %c2 = arith.constant 2 : index
    %c0_3 = arith.constant 0 : index
    %3 = vector.load %arg0[%c2, %c0_3] : memref<20x16xf32, #tpu.memory_space<vmem>>, vector<16x16xf32>
    %c16 = arith.constant 16 : index
    %c0_4 = arith.constant 0 : index
    %4 = vector.load %arg1[%c16, %c0_4] : memref<48x512xf32, #tpu.memory_space<vmem>>, vector<16x512xf32>
    %cst_5 = arith.constant dense<0.000000e+00> : vector<16x512xf32>
    %5 = tpu.matmul %3, %4, %cst_5 {dimension_numbers = #tpu.dot_dimension_numbers<[1], [0], [0], [1], [0, 0, 1, 1], [], []>} : vector<16x16xf32>, vector<16x512xf32>, vector<16x512xf32> -> vector<16x512xf32>
    %6 = arith.addf %2, %5 : vector<16x512xf32>
    %c4 = arith.constant 4 : index
    %c0_6 = arith.constant 0 : index
    %7 = vector.load %arg0[%c4, %c0_6] : memref<20x16xf32, #tpu.memory_space<vmem>>, vector<16x16xf32>
    %c32 = arith.constant 32 : index
    %c0_7 = arith.constant 0 : index
    %8 = vector.load %arg1[%c32, %c0_7] : memref<48x512xf32, #tpu.memory_space<vmem>>, vector<16x512xf32>
    %cst_8 = arith.constant dense<0.000000e+00> : vector<16x512xf32>
    %9 = tpu.matmul %7, %8, %cst_8 {dimension_numbers = #tpu.dot_dimension_numbers<[1], [0], [0], [1], [0, 0, 1, 1], [], []>} : vector<16x16xf32>, vector<16x512xf32>, vector<16x512xf32> -> vector<16x512xf32>
    %10 = arith.addf %6, %9 : vector<16x512xf32>
    %cst_9 = arith.constant dense<0.000000e+00> : vector<512xf32>
    %11 = vector.multi_reduction <add>, %10, %cst_9 [0] : vector<16x512xf32> to vector<512xf32>
    %12 = vector.shape_cast %11 : vector<512xf32> to vector<1x512xf32>
    %cst_10 = arith.constant 6.250000e-02 : f32
    %13 = vector.broadcast %cst_10 : f32 to vector<1x512xf32>
    %14 = arith.mulf %12, %13 : vector<1x512xf32>
    %15 = arith.mulf %10, %10 : vector<16x512xf32>
    %cst_11 = arith.constant dense<0.000000e+00> : vector<512xf32>
    %16 = vector.multi_reduction <add>, %15, %cst_11 [0] : vector<16x512xf32> to vector<512xf32>
    %17 = vector.shape_cast %16 : vector<512xf32> to vector<1x512xf32>
    %cst_12 = arith.constant 6.250000e-02 : f32
    %18 = vector.broadcast %cst_12 : f32 to vector<1x512xf32>
    %19 = arith.mulf %17, %18 : vector<1x512xf32>
    %20 = arith.mulf %14, %14 : vector<1x512xf32>
    %21 = arith.subf %19, %20 : vector<1x512xf32>
    %22 = vector.broadcast %14 : vector<1x512xf32> to vector<16x512xf32>
    %23 = arith.subf %10, %22 : vector<16x512xf32>
    %cst_13 = arith.constant 9.99999974E-6 : f32
    %24 = vector.broadcast %cst_13 : f32 to vector<1x512xf32>
    %25 = arith.addf %21, %24 : vector<1x512xf32>
    %26 = math.rsqrt %25 : vector<1x512xf32>
    %27 = vector.broadcast %26 : vector<1x512xf32> to vector<16x512xf32>
    %28 = arith.mulf %23, %27 : vector<16x512xf32>
    %cst_14 = arith.constant 0.000000e+00 : f32
    %29 = vector.broadcast %cst_14 : f32 to vector<16x512xf32>
    %30 = arith.maximumf %28, %29 : vector<16x512xf32>
    %c0_15 = arith.constant 0 : index
    %c0_16 = arith.constant 0 : index
    %31 = vector.load %arg2[%c0_15, %c0_16] : memref<512x128xf32, #tpu.memory_space<vmem>>, vector<512x128xf32>
    %cst_17 = arith.constant dense<0.000000e+00> : vector<16x128xf32>
    %32 = tpu.matmul %30, %31, %cst_17 {dimension_numbers = #tpu.dot_dimension_numbers<[1], [0], [0], [1], [0, 0, 1, 1], [], []>} : vector<16x512xf32>, vector<512x128xf32>, vector<16x128xf32> -> vector<16x128xf32>
    %c0_18 = arith.constant 0 : index
    %c0_19 = arith.constant 0 : index
    %33 = vector.load %arg6[%c0_18, %c0_19] : memref<16x128xf32, #tpu.memory_space<vmem>>, vector<16x128xf32>
    tpu.vector_store %arg6[%c0_18, %c0_19], %32 {strides = array<i32>} : memref<16x128xf32, #tpu.memory_space<vmem>>, vector<16x128xf32>,
    %c0_20 = arith.constant 0 : index
    %c0_21 = arith.constant 0 : index
    %34 = vector.load %arg6[%c0_20, %c0_21] : memref<16x128xf32, #tpu.memory_space<vmem>>, vector<2x128xf32>
    %c2_22 = arith.constant 2 : index
    %c0_23 = arith.constant 0 : index
    %35 = vector.load %arg6[%c2_22, %c0_23] : memref<16x128xf32, #tpu.memory_space<vmem>>, vector<2x128xf32>
    %c16_i32 = arith.constant 16 : i32
    %36 = tpu.dynamic_rotate %35 by %c16_i32 dim 1 : vector<2x128xf32>, i32 -> vector<2x128xf32>
    %37 = arith.addf %34, %36 : vector<2x128xf32>
    %c4_24 = arith.constant 4 : index
    %c0_25 = arith.constant 0 : index
    %38 = vector.load %arg6[%c4_24, %c0_25] : memref<16x128xf32, #tpu.memory_space<vmem>>, vector<2x128xf32>
    %c32_i32 = arith.constant 32 : i32
    %39 = tpu.dynamic_rotate %38 by %c32_i32 dim 1 : vector<2x128xf32>, i32 -> vector<2x128xf32>
    %40 = arith.addf %37, %39 : vector<2x128xf32>
    %c6 = arith.constant 6 : index
    %c0_26 = arith.constant 0 : index
    %41 = vector.load %arg6[%c6, %c0_26] : memref<16x128xf32, #tpu.memory_space<vmem>>, vector<2x128xf32>
    %c48_i32 = arith.constant 48 : i32
    %42 = tpu.dynamic_rotate %41 by %c48_i32 dim 1 : vector<2x128xf32>, i32 -> vector<2x128xf32>
    %43 = arith.addf %40, %42 : vector<2x128xf32>
    %c8 = arith.constant 8 : index
    %c0_27 = arith.constant 0 : index
    %44 = vector.load %arg6[%c8, %c0_27] : memref<16x128xf32, #tpu.memory_space<vmem>>, vector<2x128xf32>
    %c64_i32 = arith.constant 64 : i32
    %45 = tpu.dynamic_rotate %44 by %c64_i32 dim 1 : vector<2x128xf32>, i32 -> vector<2x128xf32>
    %46 = arith.addf %43, %45 : vector<2x128xf32>
    %c10 = arith.constant 10 : index
    %c0_28 = arith.constant 0 : index
    %47 = vector.load %arg6[%c10, %c0_28] : memref<16x128xf32, #tpu.memory_space<vmem>>, vector<2x128xf32>
    %c80_i32 = arith.constant 80 : i32
    %48 = tpu.dynamic_rotate %47 by %c80_i32 dim 1 : vector<2x128xf32>, i32 -> vector<2x128xf32>
    %49 = arith.addf %46, %48 : vector<2x128xf32>
    %c12 = arith.constant 12 : index
    %c0_29 = arith.constant 0 : index
    %50 = vector.load %arg6[%c12, %c0_29] : memref<16x128xf32, #tpu.memory_space<vmem>>, vector<2x128xf32>
    %c96_i32 = arith.constant 96 : i32
    %51 = tpu.dynamic_rotate %50 by %c96_i32 dim 1 : vector<2x128xf32>, i32 -> vector<2x128xf32>
    %52 = arith.addf %49, %51 : vector<2x128xf32>
    %c14 = arith.constant 14 : index
    %c0_30 = arith.constant 0 : index
    %53 = vector.load %arg6[%c14, %c0_30] : memref<16x128xf32, #tpu.memory_space<vmem>>, vector<2x128xf32>
    %c112_i32 = arith.constant 112 : i32
    %54 = tpu.dynamic_rotate %53 by %c112_i32 dim 1 : vector<2x128xf32>, i32 -> vector<2x128xf32>
    %55 = arith.addf %52, %54 : vector<2x128xf32>
    %cst_31 = arith.constant dense<0.000000e+00> : vector<2xf32>
    %56 = vector.multi_reduction <add>, %55, %cst_31 [1] : vector<2x128xf32> to vector<2xf32>
    %57 = vector.shape_cast %56 : vector<2xf32> to vector<2x1xf32>
    %cst_32 = arith.constant dense<0.000000e+00> : vector<1xf32>
    %58 = vector.multi_reduction <add>, %57, %cst_32 [0] : vector<2x1xf32> to vector<1xf32>
    %59 = vector.shape_cast %58 : vector<1xf32> to vector<1x1xf32>
    %cst_33 = arith.constant 3.906250e-03 : f32
    %60 = vector.broadcast %cst_33 : f32 to vector<1x1xf32>
    %61 = arith.mulf %59, %60 : vector<1x1xf32>
    %62 = arith.mulf %55, %55 : vector<2x128xf32>
    %cst_34 = arith.constant dense<0.000000e+00> : vector<2xf32>
    %63 = vector.multi_reduction <add>, %62, %cst_34 [1] : vector<2x128xf32> to vector<2xf32>
    %64 = vector.shape_cast %63 : vector<2xf32> to vector<2x1xf32>
    %cst_35 = arith.constant dense<0.000000e+00> : vector<1xf32>
    %65 = vector.multi_reduction <add>, %64, %cst_35 [0] : vector<2x1xf32> to vector<1xf32>
    %66 = vector.shape_cast %65 : vector<1xf32> to vector<1x1xf32>
    %cst_36 = arith.constant 3.906250e-03 : f32
    %67 = vector.broadcast %cst_36 : f32 to vector<1x1xf32>
    %68 = arith.mulf %66, %67 : vector<1x1xf32>
    %69 = vector.broadcast %61 : vector<1x1xf32> to vector<2x128xf32>
    %70 = arith.subf %55, %69 : vector<2x128xf32>
    %71 = arith.mulf %61, %61 : vector<1x1xf32>
    %72 = arith.subf %68, %71 : vector<1x1xf32>
    %cst_37 = arith.constant 9.99999974E-6 : f32
    %73 = vector.broadcast %cst_37 : f32 to vector<1x1xf32>
    %74 = arith.addf %72, %73 : vector<1x1xf32>
    %75 = math.rsqrt %74 : vector<1x1xf32>
    %76 = vector.broadcast %75 : vector<1x1xf32> to vector<2x128xf32>
    %77 = arith.mulf %70, %76 : vector<2x128xf32>
    %cst_38 = arith.constant 0.000000e+00 : f32
    %78 = vector.broadcast %cst_38 : f32 to vector<2x128xf32>
    %79 = arith.maximumf %77, %78 : vector<2x128xf32>
    %c0_39 = arith.constant 0 : index
    %c0_40 = arith.constant 0 : index
    %80 = vector.load %arg3[%c0_39, %c0_40] : memref<128x512xf32, #tpu.memory_space<vmem>>, vector<128x512xf32>
    %cst_41 = arith.constant dense<0.000000e+00> : vector<2x512xf32>
    %81 = tpu.matmul %79, %80, %cst_41 {dimension_numbers = #tpu.dot_dimension_numbers<[1], [0], [0], [1], [0, 0, 1, 1], [], []>} : vector<2x128xf32>, vector<128x512xf32>, vector<2x512xf32> -> vector<2x512xf32>
    %c0_42 = arith.constant 0 : index
    %c0_43 = arith.constant 0 : index
    %82 = vector.load %arg4[%c0_42, %c0_43] : memref<1x512xf32, #tpu.memory_space<vmem>>, vector<1x512xf32>
    %83 = vector.broadcast %82 : vector<1x512xf32> to vector<2x512xf32>
    %84 = arith.addf %81, %83 : vector<2x512xf32>
    %c0_44 = arith.constant 0 : index
    %c0_45 = arith.constant 0 : index
    %85 = vector.load %arg5[%c0_44, %c0_45] : memref<2x512xf32, #tpu.memory_space<vmem>>, vector<2x512xf32>
    tpu.vector_store %arg5[%c0_44, %c0_45], %84 {strides = array<i32>} : memref<2x512xf32, #tpu.memory_space<vmem>>, vector<2x512xf32>,
    return
  }
}

</mosaic_0001>

<llo_original>
// kernel: _lambda_.1
$region0: #{_lambda_.1}
  #allocation0 [shape = 'u32[]', space=smem, size = 0x4, offset = 0x4, fixed_abs, tag = 'smem constant byte address 0x4 - core index']
  #allocation1 [shape = 'u32[144,128]{1,0:T(1,128)}', space=vmem, size = 0x12000, scoped, tag = 'internal scratch']
  #allocation2 [shape = 'f32[16,128]{1,0:T(8,128)}', space=vmem, size = 0x2000, scoped, tag = 'scratch operand']
  %s0 = inlined_call_operand.vmem [shape: f32[20,16], index: 0, kind: input, shape index: {}]
  %s1 = inlined_call_operand.hbm [shape: f32[48,512], index: 1, kind: input, shape index: {}]
  %s2 = inlined_call_operand.hbm [shape: f32[512,128], index: 2, kind: input, shape index: {}]
  %s3 = inlined_call_operand.hbm [shape: f32[128,512], index: 3, kind: input, shape index: {}]
  %s4 = inlined_call_operand.vmem [shape: f32[1,512], index: 4, kind: input, shape index: {}]
  %s5 = inlined_call_operand.vmem [shape: f32[2,512], index: 5, kind: output, shape index: {}]
  %s6 = sld [smem:[#allocation0]]
  $region42: #{_lambda_.1} parent=0
    _
  %s8 = ssub.s32 1, %s6
  %s9 = scalar_select 0, %s8, %s6
  $region1: #{_lambda_.1} parent=0
    #allocation3 [shape = 'u8[98304]{0}', space=vmem, size = 0x18000, scoped, tag = 'input window, operand 1, single buffered']
    #allocation4 [shape = 's32[1]{0}', space=sflag, size = 0x4, scoped, tag = 'scoped memory for _lambda_.1']
    #allocation5 [shape = 'u8[262144]{0}', space=vmem, size = 0x40000, scoped, tag = 'input window, operand 2, single buffered']
    #allocation6 [shape = 's32[1]{0}', space=sflag, size = 0x4, scoped, tag = 'scoped memory for _lambda_.1']
    #allocation7 [shape = 'u8[262144]{0}', space=vmem, size = 0x40000, scoped, tag = 'input window, operand 3, single buffered']
    %10 = vsyncpa [#allocation4], 0
    %11 = vsyncpa [#allocation6], 0
    // Predicated region
    $region2: #{_lambda_.1} parent=1 // pred_check
      _
    $region3: #{_lambda_.1} parent=1 // pred_check_branch
      %13 = sbr.rel (0) target = $region5
    $region4: #{_lambda_.1} parent=1 // pred_region
      _
    $region5: #{_lambda_.1} parent=1 // pred_fallthru
      _
    // Predicated region
    $region6: #{_lambda_.1} parent=1 // pred_check
      _
    $region7: #{_lambda_.1} parent=1 // pred_check_branch
      %15 = sbr.rel (0) target = $region9
    $region8: #{_lambda_.1} parent=1 // pred_region
      %s17 = ssub.s32 3072, 3072
      %18 = vsyncadd [#allocation4], %s17
      %s19 = sshll.u32 [#allocation3], 4
      %s20 = int_to_ptr.vmem [resolvable:$true] %s19
      %25 = dma.hbm_to_vmem [thread:$0]  %s1, 3072, %s20, [#allocation4], 512, 512, 32
    $region9: #{_lambda_.1} parent=1 // pred_fallthru
      _
    // Predicated region
    $region10: #{_lambda_.1} parent=1 // pred_check
      _
    $region11: #{_lambda_.1} parent=1 // pred_check_branch
      %27 = sbr.rel (0) target = $region13
    $region12: #{_lambda_.1} parent=1 // pred_region
      %s29 = ssub.s32 8192, 8192
      %30 = vsyncadd [#allocation6], %s29
      %s31 = sshll.u32 [#allocation5], 4
      %s32 = int_to_ptr.vmem [resolvable:$true] %s31
      %37 = dma.hbm_to_vmem [thread:$0]  %s2, 8192, %s32, [#allocation6], 128, 128, 8
    $region13: #{_lambda_.1} parent=1 // pred_fallthru
      _
    // Predicated region
    $region14: #{_lambda_.1} parent=1 // pred_check
      _
    $region15: #{_lambda_.1} parent=1 // pred_check_branch
      %39 = sbr.rel (0) target = $region17
    $region16: #{_lambda_.1} parent=1 // pred_region
      %s41 = ssub.s32 8192, 8192
      %42 = vsyncadd [#allocation6], %s41
      %s43 = sshll.u32 [#allocation7], 4
      %s44 = int_to_ptr.vmem [resolvable:$true] %s43
      %49 = dma.hbm_to_vmem [thread:$0]  %s3, 8192, %s44, [#allocation6], 512, 512, 32
    $region17: #{_lambda_.1} parent=1 // pred_fallthru
      _
    // Predicated region
    $region18: #{_lambda_.1} parent=1 // pred_check
      _
    $region19: #{_lambda_.1} parent=1 // pred_check_branch
      %51 = sbr.rel (0) target = $region21
    $region20: #{_lambda_.1} parent=1 // pred_region
      _
    $region21: #{_lambda_.1} parent=1 // pred_fallthru
      _
    // Predicated region
    $region22: #{_lambda_.1} parent=1 // pred_check
      _
    $region23: #{_lambda_.1} parent=1 // pred_check_branch
      %53 = sbr.rel (0) target = $region25
    $region24: #{_lambda_.1} parent=1 // pred_region
      %54 = dma.done [#allocation4], 3072
    $region25: #{_lambda_.1} parent=1 // pred_fallthru
      _
    // Predicated region
    $region26: #{_lambda_.1} parent=1 // pred_check
      _
    $region27: #{_lambda_.1} parent=1 // pred_check_branch
      %56 = sbr.rel (0) target = $region29
    $region28: #{_lambda_.1} parent=1 // pred_region
      %57 = dma.done [#allocation6], 8192
    $region29: #{_lambda_.1} parent=1 // pred_fallthru
      _
    // Predicated region
    $region30: #{_lambda_.1} parent=1 // pred_check
      _
    $region31: #{_lambda_.1} parent=1 // pred_check_branch
      %59 = sbr.rel (0) target = $region33
    $region32: #{_lambda_.1} parent=1 // pred_region
      %60 = dma.done [#allocation6], 8192
    $region33: #{_lambda_.1} parent=1 // pred_fallthru
      _
    %v61 = vld [vmem:[%s0] sm:$0xff]
    %v62 = vld [vmem:[%s0 + $0x8] sm:$0xff]
    %v63 = vld [vmem:[#allocation3] sm:$0xff]
    %v64 = vld [vmem:[#allocation3 + $0x8] sm:$0xff]
    %v65 = vld [vmem:[#allocation3 + $0x10] sm:$0xff]
    %v66 = vld [vmem:[#allocation3 + $0x18] sm:$0xff]
    %v67 = vld [vmem:[#allocation3 + $0x20] sm:$0xff]
    %v68 = vld [vmem:[#allocation3 + $0x28] sm:$0xff]
    %v69 = vld [vmem:[#allocation3 + $0x30] sm:$0xff]
    %v70 = vld [vmem:[#allocation3 + $0x38] sm:$0xff]
    %v71 = vld [vmem:[%s0 + $0x2] sm:$0xff]
    %v72 = vld [vmem:[%s0 + $0xa] sm:$0xff]
    %v73 = vld [vmem:[#allocation3 + $0x40] sm:$0xff]
    %v74 = vld [vmem:[#allocation3 + $0x48] sm:$0xff]
    %v75 = vld [vmem:[#allocation3 + $0x50] sm:$0xff]
    %v76 = vld [vmem:[#allocation3 + $0x58] sm:$0xff]
    %v77 = vld [vmem:[#allocation3 + $0x60] sm:$0xff]
    %v78 = vld [vmem:[#allocation3 + $0x68] sm:$0xff]
    %v79 = vld [vmem:[#allocation3 + $0x70] sm:$0xff]
    %v80 = vld [vmem:[#allocation3 + $0x78] sm:$0xff]
    %vm81 = vcmask 130048
    %v83 = vsel %vm81, %v71, 0
    %v86 = vsel %vm81, %v72, 0
    %88 = vmatprep.subr.mxu0 %v74
    %89 = vmatpush1.msra.mxu0 %v73
    %90 = vmatprep.subr.mxu0 %v78
    %91 = vmatpush1.msra.mxu0 %v77
    %92 = vmatprep.subr.mxu0 0.0
    %93 = vmatpush1.msra.mxu0 0.0
    %94 = vmatprep.subr.mxu0 0.0
    %95 = vmatpush1.msra.mxu0 0.0
    %96 = vmatprep.subr.mxu0 0.0
    %97 = vmatpush1.msra.mxu0 0.0
    %98 = vmatprep.subr.mxu0 0.0
    %99 = vmatpush1.msra.mxu0 0.0
    %100 = vmatprep.subr.mxu0 0.0
    %101 = vmatpush1.msra.mxu0 0.0
    %102 = vmatprep.subr.mxu0 0.0
    %103 = vmatpush1.msra.mxu0 0.0
    %104 = vmatprep.subr.mxu0 0.0
    %105 = vmatpush1.msra.mxu0 0.0
    %106 = vmatprep.subr.mxu0 0.0
    %107 = vmatpush1.msra.mxu0 0.0
    %108 = vmatprep.subr.mxu0 0.0
    %109 = vmatpush1.msra.mxu0 0.0
    %110 = vmatprep.subr.mxu0 0.0
    %111 = vmatpush1.msra.mxu0 0.0
    %112 = vmatprep.subr.mxu0 0.0
    %113 = vmatpush1.msra.mxu0 0.0
    %114 = vmatprep.subr.mxu0 0.0
    %115 = vmatpush1.msra.mxu0 0.0
    %116 = vmatprep.subr.mxu0 0.0
    %117 = vmatpush1.msra.mxu0 0.0
    %118 = vmatprep.subr.mxu0 0.0
    %119 = vmatpush1.msra.mxu0 0.0
    %120 = vmatprep.subr.mxu0 0.0
    %121 = vmatpush1.msra.mxu0 0.0
    %122 = vmatprep.subr.mxu0 0.0
    %123 = vmatpush1.msra.mxu0 0.0
    %124 = vmatprep.subr.mxu0 0.0
    %125 = vmatpush1.msra.mxu0 0.0
    %126 = vmatprep.subr.mxu0 0.0
    %127 = vmatpush1.msra.mxu0 0.0
    %128 = vmatprep.subr.mxu0 0.0
    %129 = vmatpush1.msra.mxu0 0.0
    %130 = vmatprep.subr.mxu0 0.0
    %131 = vmatpush1.msra.mxu0 0.0
    %132 = vmatprep.subr.mxu0 0.0
    %133 = vmatpush1.msra.mxu0 0.0
    %134 = vmatprep.subr.mxu0 0.0
    %135 = vmatpush1.msra.mxu0 0.0
    %136 = vmatprep.subr.mxu0 0.0
    %137 = vmatpush1.msra.mxu0 0.0
    %138 = vmatprep.subr.mxu0 0.0
    %139 = vmatpush1.msra.mxu0 0.0
    %140 = vmatprep.subr.mxu0 0.0
    %141 = vmatpush1.msra.mxu0 0.0
    %142 = vmatprep.subr.mxu0 0.0
    %143 = vmatpush1.msra.mxu0 0.0
    %144 = vmatprep.subr.mxu0 0.0
    %145 = vmatpush1.msra.mxu0 0.0
    %146 = vmatprep.subr.mxu0 0.0
    %147 = vmatpush1.msra.mxu0 0.0
    %148 = vmatprep.subr.mxu0 0.0
    %149 = vmatpush1.msra.mxu0 0.0
    %150 = vmatprep.subr.mxu0 0.0
    %151 = vmatpush1.msra.mxu0 0.0
    %152 = vmatprep.mubr.f32.mxu0 0.0
    %153 = vmatmul.mubr.f32.gmra.mrb[0].mxu0 %v83
    %v154 = vpop.f32.mrb[0].mxu0
    %v155 = vadd.f32 0.0, %v154
    %v156 = vpop.f32.mrb[0].mxu0
    %v157 = vadd.f32 0.0, %v156
    %158 = vmatprep.mubr.f32.mxu0 0.0
    %159 = vmatmul.mubr.f32.gmra.mrb[0].mxu0 %v86
    %v160 = vpop.f32.mrb[0].mxu0
    %v161 = vadd.f32 0.0, %v160
    %v162 = vpop.f32.mrb[0].mxu0
    %v163 = vadd.f32 0.0, %v162
    %164 = vdwg.mxu0
    %165 = vmatprep.subr.mxu0 %v76
    %166 = vmatpush1.msra.mxu0 %v75
    %167 = vmatprep.subr.mxu0 %v80
    %168 = vmatpush1.msra.mxu0 %v79
    %169 = vmatprep.subr.mxu0 0.0
    %170 = vmatpush1.msra.mxu0 0.0
    %171 = vmatprep.subr.mxu0 0.0
    %172 = vmatpush1.msra.mxu0 0.0
    %173 = vmatprep.subr.mxu0 0.0
    %174 = vmatpush1.msra.mxu0 0.0
    %175 = vmatprep.subr.mxu0 0.0
    %176 = vmatpush1.msra.mxu0 0.0
    %177 = vmatprep.subr.mxu0 0.0
    %178 = vmatpush1.msra.mxu0 0.0
    %179 = vmatprep.subr.mxu0 0.0
    %180 = vmatpush1.msra.mxu0 0.0
    %181 = vmatprep.subr.mxu0 0.0
    %182 = vmatpush1.msra.mxu0 0.0
    %183 = vmatprep.subr.mxu0 0.0
    %184 = vmatpush1.msra.mxu0 0.0
    %185 = vmatprep.subr.mxu0 0.0
    %186 = vmatpush1.msra.mxu0 0.0
    %187 = vmatprep.subr.mxu0 0.0
    %188 = vmatpush1.msra.mxu0 0.0
    %189 = vmatprep.subr.mxu0 0.0
    %190 = vmatpush1.msra.mxu0 0.0
    %191 = vmatprep.subr.mxu0 0.0
    %192 = vmatpush1.msra.mxu0 0.0
    %193 = vmatprep.subr.mxu0 0.0
    %194 = vmatpush1.msra.mxu0 0.0
    %195 = vmatprep.subr.mxu0 0.0
    %196 = vmatpush1.msra.mxu0 0.0
    %197 = vmatprep.subr.mxu0 0.0
    %198 = vmatpush1.msra.mxu0 0.0
    %199 = vmatprep.subr.mxu0 0.0
    %200 = vmatpush1.msra.mxu0 0.0
    %201 = vmatprep.subr.mxu0 0.0
    %202 = vmatpush1.msra.mxu0 0.0
    %203 = vmatprep.subr.mxu0 0.0
    %204 = vmatpush1.msra.mxu0 0.0
    %205 = vmatprep.subr.mxu0 0.0
    %206 = vmatpush1.msra.mxu0 0.0
    %207 = vmatprep.subr.mxu0 0.0
    %208 = vmatpush1.msra.mxu0 0.0
    %209 = vmatprep.subr.mxu0 0.0
    %210 = vmatpush1.msra.mxu0 0.0
    %211 = vmatprep.subr.mxu0 0.0
    %212 = vmatpush1.msra.mxu0 0.0
    %213 = vmatprep.subr.mxu0 0.0
    %214 = vmatpush1.msra.mxu0 0.0
    %215 = vmatprep.subr.mxu0 0.0
    %216 = vmatpush1.msra.mxu0 0.0
    %217 = vmatprep.subr.mxu0 0.0
    %218 = vmatpush1.msra.mxu0 0.0
    %219 = vmatprep.subr.mxu0 0.0
    %220 = vmatpush1.msra.mxu0 0.0
    %221 = vmatprep.subr.mxu0 0.0
    %222 = vmatpush1.msra.mxu0 0.0
    %223 = vmatprep.subr.mxu0 0.0
    %224 = vmatpush1.msra.mxu0 0.0
    %225 = vmatprep.subr.mxu0 0.0
    %226 = vmatpush1.msra.mxu0 0.0
    %227 = vmatprep.subr.mxu0 0.0
    %228 = vmatpush1.msra.mxu0 0.0
    %229 = vmatprep.mubr.f32.mxu0 0.0
    %230 = vmatmul.mubr.f32.gmra.mrb[0].mxu0 %v83
    %v231 = vpop.f32.mrb[0].mxu0
    %v232 = vadd.f32 0.0, %v231
    %v233 = vpop.f32.mrb[0].mxu0
    %v234 = vadd.f32 0.0, %v233
    %235 = vmatprep.mubr.f32.mxu0 0.0
    %236 = vmatmul.mubr.f32.gmra.mrb[0].mxu0 %v86
    %v237 = vpop.f32.mrb[0].mxu0
    %v238 = vadd.f32 0.0, %v237
    %v239 = vpop.f32.mrb[0].mxu0
    %v240 = vadd.f32 0.0, %v239
    %241 = vdwg.mxu0
    %v243 = vsel %vm81, %v61, 0
    %v246 = vsel %vm81, %v62, 0
    %248 = vmatprep.subr.mxu0 %v64
    %249 = vmatpush1.msra.mxu0 %v63
    %250 = vmatprep.subr.mxu0 %v68
    %251 = vmatpush1.msra.mxu0 %v67
    %252 = vmatprep.subr.mxu0 0.0
    %253 = vmatpush1.msra.mxu0 0.0
    %254 = vmatprep.subr.mxu0 0.0
    %255 = vmatpush1.msra.mxu0 0.0
    %256 = vmatprep.subr.mxu0 0.0
    %257 = vmatpush1.msra.mxu0 0.0
    %258 = vmatprep.subr.mxu0 0.0
    %259 = vmatpush1.msra.mxu0 0.0
    %260 = vmatprep.subr.mxu0 0.0
    %261 = vmatpush1.msra.mxu0 0.0
    %262 = vmatprep.subr.mxu0 0.0
    %263 = vmatpush1.msra.mxu0 0.0
    %264 = vmatprep.subr.mxu0 0.0
    %265 = vmatpush1.msra.mxu0 0.0
    %266 = vmatprep.subr.mxu0 0.0
    %267 = vmatpush1.msra.mxu0 0.0
    %268 = vmatprep.subr.mxu0 0.0
    %269 = vmatpush1.msra.mxu0 0.0
    %270 = vmatprep.subr.mxu0 0.0
    %271 = vmatpush1.msra.mxu0 0.0
    %272 = vmatprep.subr.mxu0 0.0
    %273 = vmatpush1.msra.mxu0 0.0
    %274 = vmatprep.subr.mxu0 0.0
    %275 = vmatpush1.msra.mxu0 0.0
    %276 = vmatprep.subr.mxu0 0.0
    %277 = vmatpush1.msra.mxu0 0.0
    %278 = vmatprep.subr.mxu0 0.0
    %279 = vmatpush1.msra.mxu0 0.0
    %280 = vmatprep.subr.mxu0 0.0
    %281 = vmatpush1.msra.mxu0 0.0
    %282 = vmatprep.subr.mxu0 0.0
    %283 = vmatpush1.msra.mxu0 0.0
    %284 = vmatprep.subr.mxu0 0.0
    %285 = vmatpush1.msra.mxu0 0.0
    %286 = vmatprep.subr.mxu0 0.0
    %287 = vmatpush1.msra.mxu0 0.0
    %288 = vmatprep.subr.mxu0 0.0
    %289 = vmatpush1.msra.mxu0 0.0
    %290 = vmatprep.subr.mxu0 0.0
    %291 = vmatpush1.msra.mxu0 0.0
    %292 = vmatprep.subr.mxu0 0.0
    %293 = vmatpush1.msra.mxu0 0.0
    %294 = vmatprep.subr.mxu0 0.0
    %295 = vmatpush1.msra.mxu0 0.0
    %296 = vmatprep.subr.mxu0 0.0
    %297 = vmatpush1.msra.mxu0 0.0
    %298 = vmatprep.subr.mxu0 0.0
    %299 = vmatpush1.msra.mxu0 0.0
    %300 = vmatprep.subr.mxu0 0.0
    %301 = vmatpush1.msra.mxu0 0.0
    %302 = vmatprep.subr.mxu0 0.0
    %303 = vmatpush1.msra.mxu0 0.0
    %304 = vmatprep.subr.mxu0 0.0
    %305 = vmatpush1.msra.mxu0 0.0
    %306 = vmatprep.subr.mxu0 0.0
    %307 = vmatpush1.msra.mxu0 0.0
    %308 = vmatprep.subr.mxu0 0.0
    %309 = vmatpush1.msra.mxu0 0.0
    %310 = vmatprep.subr.mxu0 0.0
    %311 = vmatpush1.msra.mxu0 0.0
    %312 = vmatprep.mubr.f32.mxu0 0.0
    %313 = vmatmul.mubr.f32.gmra.mrb[0].mxu0 %v243
    %v314 = vpop.f32.mrb[0].mxu0
    %v315 = vadd.f32 %v155, %v314
    %v316 = vpop.f32.mrb[0].mxu0
    %v317 = vadd.f32 %v157, %v316
    %318 = vmatprep.mubr.f32.mxu0 0.0
    %319 = vmatmul.mubr.f32.gmra.mrb[0].mxu0 %v246
    %v320 = vpop.f32.mrb[0].mxu0
    %v321 = vadd.f32 %v161, %v320
    %v322 = vpop.f32.mrb[0].mxu0
    %v323 = vadd.f32 %v163, %v322
    %324 = vdwg.mxu0
    %325 = vmatprep.subr.mxu0 %v66
    %326 = vmatpush1.msra.mxu0 %v65
    %327 = vmatprep.subr.mxu0 %v70
    %328 = vmatpush1.msra.mxu0 %v69
    %329 = vmatprep.subr.mxu0 0.0
    %330 = vmatpush1.msra.mxu0 0.0
    %331 = vmatprep.subr.mxu0 0.0
    %332 = vmatpush1.msra.mxu0 0.0
    %333 = vmatprep.subr.mxu0 0.0
    %334 = vmatpush1.msra.mxu0 0.0
    %335 = vmatprep.subr.mxu0 0.0
    %336 = vmatpush1.msra.mxu0 0.0
    %337 = vmatprep.subr.mxu0 0.0
    %338 = vmatpush1.msra.mxu0 0.0
    %339 = vmatprep.subr.mxu0 0.0
    %340 = vmatpush1.msra.mxu0 0.0
    %341 = vmatprep.subr.mxu0 0.0
    %342 = vmatpush1.msra.mxu0 0.0
    %343 = vmatprep.subr.mxu0 0.0
    %344 = vmatpush1.msra.mxu0 0.0
    %345 = vmatprep.subr.mxu0 0.0
    %346 = vmatpush1.msra.mxu0 0.0
    %347 = vmatprep.subr.mxu0 0.0
    %348 = vmatpush1.msra.mxu0 0.0
    %349 = vmatprep.subr.mxu0 0.0
    %350 = vmatpush1.msra.mxu0 0.0
    %351 = vmatprep.subr.mxu0 0.0
    %352 = vmatpush1.msra.mxu0 0.0
    %353 = vmatprep.subr.mxu0 0.0
    %354 = vmatpush1.msra.mxu0 0.0
    %355 = vmatprep.subr.mxu0 0.0
    %356 = vmatpush1.msra.mxu0 0.0
    %357 = vmatprep.subr.mxu0 0.0
    %358 = vmatpush1.msra.mxu0 0.0
    %359 = vmatprep.subr.mxu0 0.0
    %360 = vmatpush1.msra.mxu0 0.0
    %361 = vmatprep.subr.mxu0 0.0
    %362 = vmatpush1.msra.mxu0 0.0
    %363 = vmatprep.subr.mxu0 0.0
    %364 = vmatpush1.msra.mxu0 0.0
    %365 = vmatprep.subr.mxu0 0.0
    %366 = vmatpush1.msra.mxu0 0.0
    %367 = vmatprep.subr.mxu0 0.0
    %368 = vmatpush1.msra.mxu0 0.0
    %369 = vmatprep.subr.mxu0 0.0
    %370 = vmatpush1.msra.mxu0 0.0
    %371 = vmatprep.subr.mxu0 0.0
    %372 = vmatpush1.msra.mxu0 0.0
    %373 = vmatprep.subr.mxu0 0.0
    %374 = vmatpush1.msra.mxu0 0.0
    %375 = vmatprep.subr.mxu0 0.0
    %376 = vmatpush1.msra.mxu0 0.0
    %377 = vmatprep.subr.mxu0 0.0
    %378 = vmatpush1.msra.mxu0 0.0
    %379 = vmatprep.subr.mxu0 0.0
    %380 = vmatpush1.msra.mxu0 0.0
    %381 = vmatprep.subr.mxu0 0.0
    %382 = vmatpush1.msra.mxu0 0.0
    %383 = vmatprep.subr.mxu0 0.0
    %384 = vmatpush1.msra.mxu0 0.0
    %385 = vmatprep.subr.mxu0 0.0
    %386 = vmatpush1.msra.mxu0 0.0
    %387 = vmatprep.subr.mxu0 0.0
    %388 = vmatpush1.msra.mxu0 0.0
    %389 = vmatprep.mubr.f32.mxu0 0.0
    %390 = vmatmul.mubr.f32.gmra.mrb[0].mxu0 %v243
    %v391 = vpop.f32.mrb[0].mxu0
    %v392 = vadd.f32 %v232, %v391
    %v393 = vpop.f32.mrb[0].mxu0
    %v394 = vadd.f32 %v234, %v393
    %395 = vmatprep.mubr.f32.mxu0 0.0
    %396 = vmatmul.mubr.f32.gmra.mrb[0].mxu0 %v246
    %v397 = vpop.f32.mrb[0].mxu0
    %v398 = vadd.f32 %v238, %v397
    %v399 = vpop.f32.mrb[0].mxu0
    %v400 = vadd.f32 %v240, %v399
    %401 = vdwg.mxu0
    %v402 = vld [vmem:[%s0 + $0x4] sm:$0xff]
    %v403 = vld [vmem:[%s0 + $0xc] sm:$0xff]
    %v404 = vld [vmem:[#allocation3 + $0x80] sm:$0xff]
    %v405 = vld [vmem:[#allocation3 + $0x88] sm:$0xff]
    %v406 = vld [vmem:[#allocation3 + $0x90] sm:$0xff]
    %v407 = vld [vmem:[#allocation3 + $0x98] sm:$0xff]
    %v408 = vld [vmem:[#allocation3 + $0xa0] sm:$0xff]
    %v409 = vld [vmem:[#allocation3 + $0xa8] sm:$0xff]
    %v410 = vld [vmem:[#allocation3 + $0xb0] sm:$0xff]
    %v411 = vld [vmem:[#allocation3 + $0xb8] sm:$0xff]
    %v413 = vsel %vm81, %v402, 0
    %v416 = vsel %vm81, %v403, 0
    %418 = vmatprep.subr.mxu0 %v405
    %419 = vmatpush1.msra.mxu0 %v404
    %420 = vmatprep.subr.mxu0 %v409
    %421 = vmatpush1.msra.mxu0 %v408
    %422 = vmatprep.subr.mxu0 0.0
    %423 = vmatpush1.msra.mxu0 0.0
    %424 = vmatprep.subr.mxu0 0.0
    %425 = vmatpush1.msra.mxu0 0.0
    %426 = vmatprep.subr.mxu0 0.0
    %427 = vmatpush1.msra.mxu0 0.0
    %428 = vmatprep.subr.mxu0 0.0
    %429 = vmatpush1.msra.mxu0 0.0
    %430 = vmatprep.subr.mxu0 0.0
    %431 = vmatpush1.msra.mxu0 0.0
    %432 = vmatprep.subr.mxu0 0.0
    %433 = vmatpush1.msra.mxu0 0.0
    %434 = vmatprep.subr.mxu0 0.0
    %435 = vmatpush1.msra.mxu0 0.0
    %436 = vmatprep.subr.mxu0 0.0
    %437 = vmatpush1.msra.mxu0 0.0
    %438 = vmatprep.subr.mxu0 0.0
    %439 = vmatpush1.msra.mxu0 0.0
    %440 = vmatprep.subr.mxu0 0.0
    %441 = vmatpush1.msra.mxu0 0.0
    %442 = vmatprep.subr.mxu0 0.0
    %443 = vmatpush1.msra.mxu0 0.0
    %444 = vmatprep.subr.mxu0 0.0
    %445 = vmatpush1.msra.mxu0 0.0
    %446 = vmatprep.subr.mxu0 0.0
    %447 = vmatpush1.msra.mxu0 0.0
    %448 = vmatprep.subr.mxu0 0.0
    %449 = vmatpush1.msra.mxu0 0.0
    %450 = vmatprep.subr.mxu0 0.0
    %451 = vmatpush1.msra.mxu0 0.0
    %452 = vmatprep.subr.mxu0 0.0
    %453 = vmatpush1.msra.mxu0 0.0
    %454 = vmatprep.subr.mxu0 0.0
    %455 = vmatpush1.msra.mxu0 0.0
    %456 = vmatprep.subr.mxu0 0.0
    %457 = vmatpush1.msra.mxu0 0.0
    %458 = vmatprep.subr.mxu0 0.0
    %459 = vmatpush1.msra.mxu0 0.0
    %460 = vmatprep.subr.mxu0 0.0
    %461 = vmatpush1.msra.mxu0 0.0
    %462 = vmatprep.subr.mxu0 0.0
    %463 = vmatpush1.msra.mxu0 0.0
    %464 = vmatprep.subr.mxu0 0.0
    %465 = vmatpush1.msra.mxu0 0.0
    %466 = vmatprep.subr.mxu0 0.0
    %467 = vmatpush1.msra.mxu0 0.0
    %468 = vmatprep.subr.mxu0 0.0
    %469 = vmatpush1.msra.mxu0 0.0
    %470 = vmatprep.subr.mxu0 0.0
    %471 = vmatpush1.msra.mxu0 0.0
    %472 = vmatprep.subr.mxu0 0.0
    %473 = vmatpush1.msra.mxu0 0.0
    %474 = vmatprep.subr.mxu0 0.0
    %475 = vmatpush1.msra.mxu0 0.0
    %476 = vmatprep.subr.mxu0 0.0
    %477 = vmatpush1.msra.mxu0 0.0
    %478 = vmatprep.subr.mxu0 0.0
    %479 = vmatpush1.msra.mxu0 0.0
    %480 = vmatprep.subr.mxu0 0.0
    %481 = vmatpush1.msra.mxu0 0.0
    %482 = vmatprep.mubr.f32.mxu0 0.0
    %483 = vmatmul.mubr.f32.gmra.mrb[0].mxu0 %v413
    %v484 = vpop.f32.mrb[0].mxu0
    %v485 = vadd.f32 0.0, %v484
    %v486 = vpop.f32.mrb[0].mxu0
    %v487 = vadd.f32 0.0, %v486
    %488 = vmatprep.mubr.f32.mxu0 0.0
    %489 = vmatmul.mubr.f32.gmra.mrb[0].mxu0 %v416
    %v490 = vpop.f32.mrb[0].mxu0
    %v491 = vadd.f32 0.0, %v490
    %v492 = vpop.f32.mrb[0].mxu0
    %v493 = vadd.f32 0.0, %v492
    %494 = vdwg.mxu0
    %495 = vmatprep.subr.mxu0 %v407
    %496 = vmatpush1.msra.mxu0 %v406
    %497 = vmatprep.subr.mxu0 %v411
    %498 = vmatpush1.msra.mxu0 %v410
    %499 = vmatprep.subr.mxu0 0.0
    %500 = vmatpush1.msra.mxu0 0.0
    %501 = vmatprep.subr.mxu0 0.0
    %502 = vmatpush1.msra.mxu0 0.0
    %503 = vmatprep.subr.mxu0 0.0
    %504 = vmatpush1.msra.mxu0 0.0
    %505 = vmatprep.subr.mxu0 0.0
    %506 = vmatpush1.msra.mxu0 0.0
    %507 = vmatprep.subr.mxu0 0.0
    %508 = vmatpush1.msra.mxu0 0.0
    %509 = vmatprep.subr.mxu0 0.0
    %510 = vmatpush1.msra.mxu0 0.0
    %511 = vmatprep.subr.mxu0 0.0
    %512 = vmatpush1.msra.mxu0 0.0
    %513 = vmatprep.subr.mxu0 0.0
    %514 = vmatpush1.msra.mxu0 0.0
    %515 = vmatprep.subr.mxu0 0.0
    %516 = vmatpush1.msra.mxu0 0.0
    %517 = vmatprep.subr.mxu0 0.0
    %518 = vmatpush1.msra.mxu0 0.0
    %519 = vmatprep.subr.mxu0 0.0
    %520 = vmatpush1.msra.mxu0 0.0
    %521 = vmatprep.subr.mxu0 0.0
    %522 = vmatpush1.msra.mxu0 0.0
    %523 = vmatprep.subr.mxu0 0.0
    %524 = vmatpush1.msra.mxu0 0.0
    %525 = vmatprep.subr.mxu0 0.0
    %526 = vmatpush1.msra.mxu0 0.0
    %527 = vmatprep.subr.mxu0 0.0
    %528 = vmatpush1.msra.mxu0 0.0
    %529 = vmatprep.subr.mxu0 0.0
    %530 = vmatpush1.msra.mxu0 0.0
    %531 = vmatprep.subr.mxu0 0.0
    %532 = vmatpush1.msra.mxu0 0.0
    %533 = vmatprep.subr.mxu0 0.0
    %534 = vmatpush1.msra.mxu0 0.0
    %535 = vmatprep.subr.mxu0 0.0
    %536 = vmatpush1.msra.mxu0 0.0
    %537 = vmatprep.subr.mxu0 0.0
    %538 = vmatpush1.msra.mxu0 0.0
    %539 = vmatprep.subr.mxu0 0.0
    %540 = vmatpush1.msra.mxu0 0.0
    %541 = vmatprep.subr.mxu0 0.0
    %542 = vmatpush1.msra.mxu0 0.0
    %543 = vmatprep.subr.mxu0 0.0
    %544 = vmatpush1.msra.mxu0 0.0
    %545 = vmatprep.subr.mxu0 0.0
    %546 = vmatpush1.msra.mxu0 0.0
    %547 = vmatprep.subr.mxu0 0.0
    %548 = vmatpush1.msra.mxu0 0.0
    %549 = vmatprep.subr.mxu0 0.0
    %550 = vmatpush1.msra.mxu0 0.0
    %551 = vmatprep.subr.mxu0 0.0
    %552 = vmatpush1.msra.mxu0 0.0
    %553 = vmatprep.subr.mxu0 0.0
    %554 = vmatpush1.msra.mxu0 0.0
    %555 = vmatprep.subr.mxu0 0.0
    %556 = vmatpush1.msra.mxu0 0.0
    %557 = vmatprep.subr.mxu0 0.0
    %558 = vmatpush1.msra.mxu0 0.0
    %559 = vmatprep.mubr.f32.mxu0 0.0
    %560 = vmatmul.mubr.f32.gmra.mrb[0].mxu0 %v413
    %v561 = vpop.f32.mrb[0].mxu0
    %v562 = vadd.f32 0.0, %v561
    %v563 = vpop.f32.mrb[0].mxu0
    %v564 = vadd.f32 0.0, %v563
    %565 = vmatprep.mubr.f32.mxu0 0.0
    %566 = vmatmul.mubr.f32.gmra.mrb[0].mxu0 %v416
    %v567 = vpop.f32.mrb[0].mxu0
    %v568 = vadd.f32 0.0, %v567
    %v569 = vpop.f32.mrb[0].mxu0
    %v570 = vadd.f32 0.0, %v569
    %571 = vdwg.mxu0
    %v572 = vadd.f32 %v315, %v485
    %v573 = vadd.f32 %v317, %v487
    %v574 = vadd.f32 %v392, %v562
    %v575 = vadd.f32 %v394, %v564
    %v576 = vadd.f32 %v321, %v491
    %v577 = vadd.f32 %v323, %v493
    %v578 = vadd.f32 %v398, %v568
    %v579 = vadd.f32 %v400, %v570
    %v580 = vadd.f32 %v572, %v576
    %v581 = vrot.slane %v580, 4
    %v582 = vadd.f32 %v580, %v581
    %v583 = vrot.slane %v582, 2
    %v584 = vadd.f32 %v582, %v583
    %v585 = vrot.slane %v584, 1
    %v586 = vadd.f32 %v584, %v585
    %v587 = vadd.f32 %v573, %v577
    %v588 = vrot.slane %v587, 4
    %v589 = vadd.f32 %v587, %v588
    %v590 = vrot.slane %v589, 2
    %v591 = vadd.f32 %v589, %v590
    %v592 = vrot.slane %v591, 1
    %v593 = vadd.f32 %v591, %v592
    %v594 = vadd.f32 %v574, %v578
    %v595 = vrot.slane %v594, 4
    %v596 = vadd.f32 %v594, %v595
    %v597 = vrot.slane %v596, 2
    %v598 = vadd.f32 %v596, %v597
    %v599 = vrot.slane %v598, 1
    %v600 = vadd.f32 %v598, %v599
    %v601 = vadd.f32 %v575, %v579
    %v602 = vrot.slane %v601, 4
    %v603 = vadd.f32 %v601, %v602
    %v604 = vrot.slane %v603, 2
    %v605 = vadd.f32 %v603, %v604
    %v606 = vrot.slane %v605, 1
    %v607 = vadd.f32 %v605, %v606
    %v608 = vmul.f32 %v586, 0.0625
    %v609 = vmul.f32 %v593, 0.0625
    %v610 = vmul.f32 %v600, 0.0625
    %v611 = vmul.f32 %v607, 0.0625
    %v612 = vmul.f32 %v572, %v572
    %v613 = vmul.f32 %v573, %v573
    %v614 = vmul.f32 %v574, %v574
    %v615 = vmul.f32 %v575, %v575
    %v616 = vmul.f32 %v576, %v576
    %v617 = vmul.f32 %v577, %v577
    %v618 = vmul.f32 %v578, %v578
    %v619 = vmul.f32 %v579, %v579
    %v620 = vadd.f32 %v612, %v616
    %v621 = vrot.slane %v620, 4
    %v622 = vadd.f32 %v620, %v621
    %v623 = vrot.slane %v622, 2
    %v624 = vadd.f32 %v622, %v623
    %v625 = vrot.slane %v624, 1
    %v626 = vadd.f32 %v624, %v625
    %v627 = vadd.f32 %v613, %v617
    %v628 = vrot.slane %v627, 4
    %v629 = vadd.f32 %v627, %v628
    %v630 = vrot.slane %v629, 2
    %v631 = vadd.f32 %v629, %v630
    %v632 = vrot.slane %v631, 1
    %v633 = vadd.f32 %v631, %v632
    %v634 = vadd.f32 %v614, %v618
    %v635 = vrot.slane %v634, 4
    %v636 = vadd.f32 %v634, %v635
    %v637 = vrot.slane %v636, 2
    %v638 = vadd.f32 %v636, %v637
    %v639 = vrot.slane %v638, 1
    %v640 = vadd.f32 %v638, %v639
    %v641 = vadd.f32 %v615, %v619
    %v642 = vrot.slane %v641, 4
    %v643 = vadd.f32 %v641, %v642
    %v644 = vrot.slane %v643, 2
    %v645 = vadd.f32 %v643, %v644
    %v646 = vrot.slane %v645, 1
    %v647 = vadd.f32 %v645, %v646
    %v648 = vmul.f32 %v626, 0.0625
    %v649 = vmul.f32 %v633, 0.0625
    %v650 = vmul.f32 %v640, 0.0625
    %v651 = vmul.f32 %v647, 0.0625
    %v652 = vmul.f32 %v608, %v608
    %v653 = vmul.f32 %v609, %v609
    %v654 = vmul.f32 %v610, %v610
    %v655 = vmul.f32 %v611, %v611
    %v656 = vsub.f32 %v648, %v652
    %v657 = vsub.f32 %v649, %v653
    %v658 = vsub.f32 %v650, %v654
    %v659 = vsub.f32 %v651, %v655
    %v660 = vsub.f32 %v572, %v608
    %v661 = vsub.f32 %v573, %v609
    %v662 = vsub.f32 %v574, %v610
    %v663 = vsub.f32 %v575, %v611
    %v664 = vsub.f32 %v576, %v608
    %v665 = vsub.f32 %v577, %v609
    %v666 = vsub.f32 %v578, %v610
    %v667 = vsub.f32 %v579, %v611
    %v668 = vadd.f32 %v656, 1e-05
    %v669 = vadd.f32 %v657, 1e-05
    %v670 = vadd.f32 %v658, 1e-05
    %v671 = vadd.f32 %v659, 1e-05
    %v672 = vrsqrt.pop %v668
    %v673 = vrsqrt.pop %v669
    %v674 = vrsqrt.pop %v670
    %v675 = vrsqrt.pop %v671
    %v676 = vmul.f32 %v660, %v672
    %v677 = vmul.f32 %v661, %v673
    %v678 = vmul.f32 %v662, %v674
    %v679 = vmul.f32 %v663, %v675
    %v680 = vmul.f32 %v664, %v672
    %v681 = vmul.f32 %v665, %v673
    %v682 = vmul.f32 %v666, %v674
    %v683 = vmul.f32 %v667, %v675
    %v684 = vmax.f32 %v676, 0.0
    %v685 = vmax.f32 %v677, 0.0
    %v686 = vmax.f32 %v678, 0.0
    %v687 = vmax.f32 %v679, 0.0
    %v688 = vmax.f32 %v680, 0.0
    %v689 = vmax.f32 %v681, 0.0
    %v690 = vmax.f32 %v682, 0.0
    %v691 = vmax.f32 %v683, 0.0
    %v692 = vld [vmem:[#allocation5] sm:$0xff]
    %v693 = vld [vmem:[#allocation5 + $0x8] sm:$0xff]
    %v694 = vld [vmem:[#allocation5 + $0x10] sm:$0xff]
    %v695 = vld [vmem:[#allocation5 + $0x18] sm:$0xff]
    %v696 = vld [vmem:[#allocation5 + $0x20] sm:$0xff]
    %v697 = vld [vmem:[#allocation5 + $0x28] sm:$0xff]
    %v698 = vld [vmem:[#allocation5 + $0x30] sm:$0xff]
    %v699 = vld [vmem:[#allocation5 + $0x38] sm:$0xff]
    %v700 = vld [vmem:[#allocation5 + $0x40] sm:$0xff]
    %v701 = vld [vmem:[#allocation5 + $0x48] sm:$0xff]
    %v702 = vld [vmem:[#allocation5 + $0x50] sm:$0xff]
    %v703 = vld [vmem:[#allocation5 + $0x58] sm:$0xff]
    %v704 = vld [vmem:[#allocation5 + $0x60] sm:$0xff]
    %v705 = vld [vmem:[#allocation5 + $0x68] sm:$0xff]
    %v706 = vld [vmem:[#allocation5 + $0x70] sm:$0xff]
    %v707 = vld [vmem:[#allocation5 + $0x78] sm:$0xff]
    %v708 = vld [vmem:[#allocation5 + $0x80] sm:$0xff]
    %v709 = vld [vmem:[#allocation5 + $0x88] sm:$0xff]
    %v710 = vld [vmem:[#allocation5 + $0x90] sm:$0xff]
    %v711 = vld [vmem:[#allocation5 + $0x98] sm:$0xff]
    %v712 = vld [vmem:[#allocation5 + $0xa0] sm:$0xff]
    %v713 = vld [vmem:[#allocation5 + $0xa8] sm:$0xff]
    %v714 = vld [vmem:[#allocation5 + $0xb0] sm:$0xff]
    %v715 = vld [vmem:[#allocation5 + $0xb8] sm:$0xff]
    %v716 = vld [vmem:[#allocation5 + $0xc0] sm:$0xff]
    %v717 = vld [vmem:[#allocation5 + $0xc8] sm:$0xff]
    %v718 = vld [vmem:[#allocation5 + $0xd0] sm:$0xff]
    %v719 = vld [vmem:[#allocation5 + $0xd8] sm:$0xff]
    %v720 = vld [vmem:[#allocation5 + $0xe0] sm:$0xff]
    %v721 = vld [vmem:[#allocation5 + $0xe8] sm:$0xff]
    %v722 = vld [vmem:[#allocation5 + $0xf0] sm:$0xff]
    %v723 = vld [vmem:[#allocation5 + $0xf8] sm:$0xff]
    %v724 = vld [vmem:[#allocation5 + $0x100] sm:$0xff]
    %v725 = vld [vmem:[#allocation5 + $0x108] sm:$0xff]
    %v726 = vld [vmem:[#allocation5 + $0x110] sm:$0xff]
    %v727 = vld [vmem:[#allocation5 + $0x118] sm:$0xff]
    %v728 = vld [vmem:[#allocation5 + $0x120] sm:$0xff]
    %v729 = vld [vmem:[#allocation5 + $0x128] sm:$0xff]
    %v730 = vld [vmem:[#allocation5 + $0x130] sm:$0xff]
    %v731 = vld [vmem:[#allocation5 + $0x138] sm:$0xff]
    %v732 = vld [vmem:[#allocation5 + $0x140] sm:$0xff]
    %v733 = vld [vmem:[#allocation5 + $0x148] sm:$0xff]
    %v734 = vld [vmem:[#allocation5 + $0x150] sm:$0xff]
    %v735 = vld [vmem:[#allocation5 + $0x158] sm:$0xff]
    %v736 = vld [vmem:[#allocation5 + $0x160] sm:$0xff]
    %v737 = vld [vmem:[#allocation5 + $0x168] sm:$0xff]
    %v738 = vld [vmem:[#allocation5 + $0x170] sm:$0xff]
    %v739 = vld [vmem:[#allocation5 + $0x178] sm:$0xff]
    %v740 = vld [vmem:[#allocation5 + $0x180] sm:$0xff]
    %v741 = vld [vmem:[#allocation5 + $0x188] sm:$0xff]
    %v742 = vld [vmem:[#allocation5 + $0x190] sm:$0xff]
    %v743 = vld [vmem:[#allocation5 + $0x198] sm:$0xff]
    %v744 = vld [vmem:[#allocation5 + $0x1a0] sm:$0xff]
    %v745 = vld [vmem:[#allocation5 + $0x1a8] sm:$0xff]
    %v746 = vld [vmem:[#allocation5 + $0x1b0] sm:$0xff]
    %v747 = vld [vmem:[#allocation5 + $0x1b8] sm:$0xff]
    %v748 = vld [vmem:[#allocation5 + $0x1c0] sm:$0xff]
    %v749 = vld [vmem:[#allocation5 + $0x1c8] sm:$0xff]
    %v750 = vld [vmem:[#allocation5 + $0x1d0] sm:$0xff]
    %v751 = vld [vmem:[#allocation5 + $0x1d8] sm:$0xff]
    %v752 = vld [vmem:[#allocation5 + $0x1e0] sm:$0xff]
    %v753 = vld [vmem:[#allocation5 + $0x1e8] sm:$0xff]
    %v754 = vld [vmem:[#allocation5 + $0x1f0] sm:$0xff]
    %v755 = vld [vmem:[#allocation5 + $0x1f8] sm:$0xff]
    %756 = vmatprep.subr.mxu0 0.0
    %757 = vmatpush1.msra.mxu0 %v692
    %758 = vmatprep.subr.mxu0 0.0
    %759 = vmatpush1.msra.mxu0 %v693
    %760 = vmatprep.subr.mxu0 0.0
    %761 = vmatpush1.msra.mxu0 %v694
    %762 = vmatprep.subr.mxu0 0.0
    %763 = vmatpush1.msra.mxu0 %v695
    %764 = vmatprep.subr.mxu0 0.0
    %765 = vmatpush1.msra.mxu0 %v696
    %766 = vmatprep.subr.mxu0 0.0
    %767 = vmatpush1.msra.mxu0 %v697
    %768 = vmatprep.subr.mxu0 0.0
    %769 = vmatpush1.msra.mxu0 %v698
    %770 = vmatprep.subr.mxu0 0.0
    %771 = vmatpush1.msra.mxu0 %v699
    %772 = vmatprep.subr.mxu0 0.0
    %773 = vmatpush1.msra.mxu0 %v700
    %774 = vmatprep.subr.mxu0 0.0
    %775 = vmatpush1.msra.mxu0 %v701
    %776 = vmatprep.subr.mxu0 0.0
    %777 = vmatpush1.msra.mxu0 %v702
    %778 = vmatprep.subr.mxu0 0.0
    %779 = vmatpush1.msra.mxu0 %v703
    %780 = vmatprep.subr.mxu0 0.0
    %781 = vmatpush1.msra.mxu0 %v704
    %782 = vmatprep.subr.mxu0 0.0
    %783 = vmatpush1.msra.mxu0 %v705
    %784 = vmatprep.subr.mxu0 0.0
    %785 = vmatpush1.msra.mxu0 %v706
    %786 = vmatprep.subr.mxu0 0.0
    %787 = vmatpush1.msra.mxu0 %v707
    %788 = vmatprep.subr.mxu0 0.0
    %789 = vmatpush1.msra.mxu0 %v708
    %790 = vmatprep.subr.mxu0 0.0
    %791 = vmatpush1.msra.mxu0 %v709
    %792 = vmatprep.subr.mxu0 0.0
    %793 = vmatpush1.msra.mxu0 %v710
    %794 = vmatprep.subr.mxu0 0.0
    %795 = vmatpush1.msra.mxu0 %v711
    %796 = vmatprep.subr.mxu0 0.0
    %797 = vmatpush1.msra.mxu0 %v712
    %798 = vmatprep.subr.mxu0 0.0
    %799 = vmatpush1.msra.mxu0 %v713
    %800 = vmatprep.subr.mxu0 0.0
    %801 = vmatpush1.msra.mxu0 %v714
    %802 = vmatprep.subr.mxu0 0.0
    %803 = vmatpush1.msra.mxu0 %v715
    %804 = vmatprep.subr.mxu0 0.0
    %805 = vmatpush1.msra.mxu0 %v716
    %806 = vmatprep.subr.mxu0 0.0
    %807 = vmatpush1.msra.mxu0 %v717
    %808 = vmatprep.subr.mxu0 0.0
    %809 = vmatpush1.msra.mxu0 %v718
    %810 = vmatprep.subr.mxu0 0.0
    %811 = vmatpush1.msra.mxu0 %v719
    %812 = vmatprep.subr.mxu0 0.0
    %813 = vmatpush1.msra.mxu0 %v720
    %814 = vmatprep.subr.mxu0 0.0
    %815 = vmatpush1.msra.mxu0 %v721
    %816 = vmatprep.subr.mxu0 0.0
    %817 = vmatpush1.msra.mxu0 %v722
    %818 = vmatprep.subr.mxu0 0.0
    %819 = vmatpush1.msra.mxu0 %v723
    %820 = vmatprep.mubr.f32.mxu0 %v685
    %821 = vmatmul.mubr.f32.gmra.mrb[0].mxu0 %v684
    %v822 = vpop.f32.mrb[0].mxu0
    %v823 = vadd.f32 0.0, %v822
    %v824 = vpop.f32.mrb[0].mxu0
    %825 = vmatprep.mubr.f32.mxu0 %v689
    %826 = vmatmul.mubr.f32.gmra.mrb[0].mxu0 %v688
    %v827 = vpop.f32.mrb[0].mxu0
    %v828 = vadd.f32 0.0, %v827
    %v829 = vpop.f32.mrb[0].mxu0
    %830 = vdwg.mxu0
    %831 = vmatprep.subr.mxu0 0.0
    %832 = vmatpush1.msra.mxu0 %v724
    %833 = vmatprep.subr.mxu0 0.0
    %834 = vmatpush1.msra.mxu0 %v725
    %835 = vmatprep.subr.mxu0 0.0
    %836 = vmatpush1.msra.mxu0 %v726
    %837 = vmatprep.subr.mxu0 0.0
    %838 = vmatpush1.msra.mxu0 %v727
    %839 = vmatprep.subr.mxu0 0.0
    %840 = vmatpush1.msra.mxu0 %v728
    %841 = vmatprep.subr.mxu0 0.0
    %842 = vmatpush1.msra.mxu0 %v729
    %843 = vmatprep.subr.mxu0 0.0
    %844 = vmatpush1.msra.mxu0 %v730
    %845 = vmatprep.subr.mxu0 0.0
    %846 = vmatpush1.msra.mxu0 %v731
    %847 = vmatprep.subr.mxu0 0.0
    %848 = vmatpush1.msra.mxu0 %v732
    %849 = vmatprep.subr.mxu0 0.0
    %850 = vmatpush1.msra.mxu0 %v733
    %851 = vmatprep.subr.mxu0 0.0
    %852 = vmatpush1.msra.mxu0 %v734
    %853 = vmatprep.subr.mxu0 0.0
    %854 = vmatpush1.msra.mxu0 %v735
    %855 = vmatprep.subr.mxu0 0.0
    %856 = vmatpush1.msra.mxu0 %v736
    %857 = vmatprep.subr.mxu0 0.0
    %858 = vmatpush1.msra.mxu0 %v737
    %859 = vmatprep.subr.mxu0 0.0
    %860 = vmatpush1.msra.mxu0 %v738
    %861 = vmatprep.subr.mxu0 0.0
    %862 = vmatpush1.msra.mxu0 %v739
    %863 = vmatprep.subr.mxu0 0.0
    %864 = vmatpush1.msra.mxu0 %v740
    %865 = vmatprep.subr.mxu0 0.0
    %866 = vmatpush1.msra.mxu0 %v741
    %867 = vmatprep.subr.mxu0 0.0
    %868 = vmatpush1.msra.mxu0 %v742
    %869 = vmatprep.subr.mxu0 0.0
    %870 = vmatpush1.msra.mxu0 %v743
    %871 = vmatprep.subr.mxu0 0.0
    %872 = vmatpush1.msra.mxu0 %v744
    %873 = vmatprep.subr.mxu0 0.0
    %874 = vmatpush1.msra.mxu0 %v745
    %875 = vmatprep.subr.mxu0 0.0
    %876 = vmatpush1.msra.mxu0 %v746
    %877 = vmatprep.subr.mxu0 0.0
    %878 = vmatpush1.msra.mxu0 %v747
    %879 = vmatprep.subr.mxu0 0.0
    %880 = vmatpush1.msra.mxu0 %v748
    %881 = vmatprep.subr.mxu0 0.0
    %882 = vmatpush1.msra.mxu0 %v749
    %883 = vmatprep.subr.mxu0 0.0
    %884 = vmatpush1.msra.mxu0 %v750
    %885 = vmatprep.subr.mxu0 0.0
    %886 = vmatpush1.msra.mxu0 %v751
    %887 = vmatprep.subr.mxu0 0.0
    %888 = vmatpush1.msra.mxu0 %v752
    %889 = vmatprep.subr.mxu0 0.0
    %890 = vmatpush1.msra.mxu0 %v753
    %891 = vmatprep.subr.mxu0 0.0
    %892 = vmatpush1.msra.mxu0 %v754
    %893 = vmatprep.subr.mxu0 0.0
    %894 = vmatpush1.msra.mxu0 %v755
    %895 = vmatprep.mubr.f32.mxu0 %v687
    %896 = vmatmul.mubr.f32.gmra.mrb[0].mxu0 %v686
    %v897 = vpop.f32.mrb[0].mxu0
    %v898 = vadd.f32 %v823, %v897
    %v899 = vpop.f32.mrb[0].mxu0
    %900 = vmatprep.mubr.f32.mxu0 %v691
    %901 = vmatmul.mubr.f32.gmra.mrb[0].mxu0 %v690
    %v902 = vpop.f32.mrb[0].mxu0
    %v903 = vadd.f32 %v828, %v902
    %v904 = vpop.f32.mrb[0].mxu0
    %905 = vdwg.mxu0
    %906 = vst [vmem:[#allocation2] sm:$0xff] %v898
    %907 = vst [vmem:[#allocation2 + $0x8] sm:$0xff] %v903
    %v908 = vld [vmem:[#allocation2] sm:$0x3]
    %v909 = vld [vmem:[#allocation2 + $0x2] sm:$0x3]
    %910 = vrot.lane.b32.xlu0 %v909, 16
    %v911 = vpop.permute.xlu0 %910
    %v912 = vadd.f32 %v908, %v911
    %v913 = vld [vmem:[#allocation2 + $0x4] sm:$0x3]
    %914 = vrot.lane.b32.xlu0 %v913, 32
    %v915 = vpop.permute.xlu0 %914
    %v916 = vadd.f32 %v912, %v915
    %v917 = vld [vmem:[#allocation2 + $0x6] sm:$0x3]
    %918 = vrot.lane.b32.xlu0 %v917, 48
    %v919 = vpop.permute.xlu0 %918
    %v920 = vadd.f32 %v916, %v919
    %v921 = vld [vmem:[#allocation2 + $0x8] sm:$0x3]
    %922 = vrot.lane.b32.xlu0 %v921, 64
    %v923 = vpop.permute.xlu0 %922
    %v924 = vadd.f32 %v920, %v923
    %v925 = vld [vmem:[#allocation2 + $0xa] sm:$0x3]
    %926 = vrot.lane.b32.xlu0 %v925, 80
    %v927 = vpop.permute.xlu0 %926
    %v928 = vadd.f32 %v924, %v927
    %v929 = vld [vmem:[#allocation2 + $0xc] sm:$0x3]
    %930 = vrot.lane.b32.xlu0 %v929, 96
    %v931 = vpop.permute.xlu0 %930
    %v932 = vadd.f32 %v928, %v931
    %v933 = vld [vmem:[#allocation2 + $0xe] sm:$0x3]
    %934 = vrot.lane.b32.xlu0 %v933, 112
    %v935 = vpop.permute.xlu0 %934
    %v936 = vadd.f32 %v932, %v935
    %vm937 = vcmask 1041408
    %v938 = vsel %vm937, %v936, 0.0
    %939 = vadd.xlane.f32.xlu0 %v938
    %v940 = vpop.xlane.xlu0 %939
    %v941 = vsel %vm937, %v940, 0.0
    %v942 = vrot.slane %v941, 4
    %v943 = vadd.f32 %v941, %v942
    %v944 = vrot.slane %v943, 2
    %v945 = vadd.f32 %v943, %v944
    %v946 = vrot.slane %v945, 1
    %v947 = vadd.f32 %v945, %v946
    %v948 = vmul.f32 %v947, 0.00390625
    %v949 = vmul.f32 %v936, %v936
    %v950 = vsel %vm937, %v949, 0.0
    %951 = vadd.xlane.f32.xlu0 %v950
    %v952 = vpop.xlane.xlu0 %951
    %v953 = vsel %vm937, %v952, 0.0
    %v954 = vrot.slane %v953, 4
    %v955 = vadd.f32 %v953, %v954
    %v956 = vrot.slane %v955, 2
    %v957 = vadd.f32 %v955, %v956
    %v958 = vrot.slane %v957, 1
    %v959 = vadd.f32 %v957, %v958
    %v960 = vmul.f32 %v959, 0.00390625
    %v961 = vsub.f32 %v936, %v948
    %v962 = vmul.f32 %v948, %v948
    %v963 = vsub.f32 %v960, %v962
    %v964 = vadd.f32 %v963, 1e-05
    %v965 = vrsqrt.pop %v964
    %v966 = vmul.f32 %v961, %v965
    %v967 = vmax.f32 %v966, 0.0
    %v968 = vld [vmem:[#allocation7] sm:$0xff]
    %v969 = vld [vmem:[#allocation7 + $0x8] sm:$0xff]
    %v970 = vld [vmem:[#allocation7 + $0x10] sm:$0xff]
    %v971 = vld [vmem:[#allocation7 + $0x18] sm:$0xff]
    %v972 = vld [vmem:[#allocation7 + $0x20] sm:$0xff]
    %v973 = vld [vmem:[#allocation7 + $0x28] sm:$0xff]
    %v974 = vld [vmem:[#allocation7 + $0x30] sm:$0xff]
    %v975 = vld [vmem:[#allocation7 + $0x38] sm:$0xff]
    %v976 = vld [vmem:[#allocation7 + $0x40] sm:$0xff]
    %v977 = vld [vmem:[#allocation7 + $0x48] sm:$0xff]
    %v978 = vld [vmem:[#allocation7 + $0x50] sm:$0xff]
    %v979 = vld [vmem:[#allocation7 + $0x58] sm:$0xff]
    %v980 = vld [vmem:[#allocation7 + $0x60] sm:$0xff]
    %v981 = vld [vmem:[#allocation7 + $0x68] sm:$0xff]
    %v982 = vld [vmem:[#allocation7 + $0x70] sm:$0xff]
    %v983 = vld [vmem:[#allocation7 + $0x78] sm:$0xff]
    %v984 = vld [vmem:[#allocation7 + $0x80] sm:$0xff]
    %v985 = vld [vmem:[#allocation7 + $0x88] sm:$0xff]
    %v986 = vld [vmem:[#allocation7 + $0x90] sm:$0xff]
    %v987 = vld [vmem:[#allocation7 + $0x98] sm:$0xff]
    %v988 = vld [vmem:[#allocation7 + $0xa0] sm:$0xff]
    %v989 = vld [vmem:[#allocation7 + $0xa8] sm:$0xff]
    %v990 = vld [vmem:[#allocation7 + $0xb0] sm:$0xff]
    %v991 = vld [vmem:[#allocation7 + $0xb8] sm:$0xff]
    %v992 = vld [vmem:[#allocation7 + $0xc0] sm:$0xff]
    %v993 = vld [vmem:[#allocation7 + $0xc8] sm:$0xff]
    %v994 = vld [vmem:[#allocation7 + $0xd0] sm:$0xff]
    %v995 = vld [vmem:[#allocation7 + $0xd8] sm:$0xff]
    %v996 = vld [vmem:[#allocation7 + $0xe0] sm:$0xff]
    %v997 = vld [vmem:[#allocation7 + $0xe8] sm:$0xff]
    %v998 = vld [vmem:[#allocation7 + $0xf0] sm:$0xff]
    %v999 = vld [vmem:[#allocation7 + $0xf8] sm:$0xff]
    %v1000 = vld [vmem:[#allocation7 + $0x100] sm:$0xff]
    %v1001 = vld [vmem:[#allocation7 + $0x108] sm:$0xff]
    %v1002 = vld [vmem:[#allocation7 + $0x110] sm:$0xff]
    %v1003 = vld [vmem:[#allocation7 + $0x118] sm:$0xff]
    %v1004 = vld [vmem:[#allocation7 + $0x120] sm:$0xff]
    %v1005 = vld [vmem:[#allocation7 + $0x128] sm:$0xff]
    %v1006 = vld [vmem:[#allocation7 + $0x130] sm:$0xff]
    %v1007 = vld [vmem:[#allocation7 + $0x138] sm:$0xff]
    %v1008 = vld [vmem:[#allocation7 + $0x140] sm:$0xff]
    %v1009 = vld [vmem:[#allocation7 + $0x148] sm:$0xff]
    %v1010 = vld [vmem:[#allocation7 + $0x150] sm:$0xff]
    %v1011 = vld [vmem:[#allocation7 + $0x158] sm:$0xff]
    %v1012 = vld [vmem:[#allocation7 + $0x160] sm:$0xff]
    %v1013 = vld [vmem:[#allocation7 + $0x168] sm:$0xff]
    %v1014 = vld [vmem:[#allocation7 + $0x170] sm:$0xff]
    %v1015 = vld [vmem:[#allocation7 + $0x178] sm:$0xff]
    %v1016 = vld [vmem:[#allocation7 + $0x180] sm:$0xff]
    %v1017 = vld [vmem:[#allocation7 + $0x188] sm:$0xff]
    %v1018 = vld [vmem:[#allocation7 + $0x190] sm:$0xff]
    %v1019 = vld [vmem:[#allocation7 + $0x198] sm:$0xff]
    %v1020 = vld [vmem:[#allocation7 + $0x1a0] sm:$0xff]
    %v1021 = vld [vmem:[#allocation7 + $0x1a8] sm:$0xff]
    %v1022 = vld [vmem:[#allocation7 + $0x1b0] sm:$0xff]
    %v1023 = vld [vmem:[#allocation7 + $0x1b8] sm:$0xff]
    %v1024 = vld [vmem:[#allocation7 + $0x1c0] sm:$0xff]
    %v1025 = vld [vmem:[#allocation7 + $0x1c8] sm:$0xff]
    %v1026 = vld [vmem:[#allocation7 + $0x1d0] sm:$0xff]
    %v1027 = vld [vmem:[#allocation7 + $0x1d8] sm:$0xff]
    %v1028 = vld [vmem:[#allocation7 + $0x1e0] sm:$0xff]
    %v1029 = vld [vmem:[#allocation7 + $0x1e8] sm:$0xff]
    %v1030 = vld [vmem:[#allocation7 + $0x1f0] sm:$0xff]
    %v1031 = vld [vmem:[#allocation7 + $0x1f8] sm:$0xff]
    %v1032 = vld [vmem:[%s4] sm:$0xf]
    %v1034 = vlaneseq
    %v1035 = vshrl.u32 %v1034, 7
    %v1036 = vsub.s32 0, %v1035
    %v1037 = vrot.slane %v1032, %v1036
    %v1038 = vlaneseq
    %v1039 = vshrl.u32 %v1038, 7
    %v1040 = vsub.s32 1, %v1039
    %v1041 = vrot.slane %v1032, %v1040
    %v1042 = vlaneseq
    %v1043 = vshrl.u32 %v1042, 7
    %v1044 = vsub.s32 2, %v1043
    %v1045 = vrot.slane %v1032, %v1044
    %v1046 = vlaneseq
    %v1047 = vshrl.u32 %v1046, 7
    %v1048 = vsub.s32 3, %v1047
    %v1049 = vrot.slane %v1032, %v1048
    %1054 = vmatprep.subr.mxu0 %v969
    %1055 = vmatpush1.msra.mxu0 %v968
    %1056 = vmatprep.subr.mxu0 %v973
    %1057 = vmatpush1.msra.mxu0 %v972
    %1058 = vmatprep.subr.mxu0 %v977
    %1059 = vmatpush1.msra.mxu0 %v976
    %1060 = vmatprep.subr.mxu0 %v981
    %1061 = vmatpush1.msra.mxu0 %v980
    %1062 = vmatprep.subr.mxu0 %v985
    %1063 = vmatpush1.msra.mxu0 %v984
    %1064 = vmatprep.subr.mxu0 %v989
    %1065 = vmatpush1.msra.mxu0 %v988
    %1066 = vmatprep.subr.mxu0 %v993
    %1067 = vmatpush1.msra.mxu0 %v992
    %1068 = vmatprep.subr.mxu0 %v997
    %1069 = vmatpush1.msra.mxu0 %v996
    %1070 = vmatprep.subr.mxu0 %v1001
    %1071 = vmatpush1.msra.mxu0 %v1000
    %1072 = vmatprep.subr.mxu0 %v1005
    %1073 = vmatpush1.msra.mxu0 %v1004
    %1074 = vmatprep.subr.mxu0 %v1009
    %1075 = vmatpush1.msra.mxu0 %v1008
    %1076 = vmatprep.subr.mxu0 %v1013
    %1077 = vmatpush1.msra.mxu0 %v1012
    %1078 = vmatprep.subr.mxu0 %v1017
    %1079 = vmatpush1.msra.mxu0 %v1016
    %1080 = vmatprep.subr.mxu0 %v1021
    %1081 = vmatpush1.msra.mxu0 %v1020
    %1082 = vmatprep.subr.mxu0 %v1025
    %1083 = vmatpush1.msra.mxu0 %v1024
    %1084 = vmatprep.subr.mxu0 %v1029
    %1085 = vmatpush1.msra.mxu0 %v1028
    %1086 = vmatprep.subr.mxu0 0.0
    %1087 = vmatpush1.msra.mxu0 0.0
    %1088 = vmatprep.subr.mxu0 0.0
    %1089 = vmatpush1.msra.mxu0 0.0
    %1090 = vmatprep.subr.mxu0 0.0
    %1091 = vmatpush1.msra.mxu0 0.0
    %1092 = vmatprep.subr.mxu0 0.0
    %1093 = vmatpush1.msra.mxu0 0.0
    %1094 = vmatprep.subr.mxu0 0.0
    %1095 = vmatpush1.msra.mxu0 0.0
    %1096 = vmatprep.subr.mxu0 0.0
    %1097 = vmatpush1.msra.mxu0 0.0
    %1098 = vmatprep.subr.mxu0 0.0
    %1099 = vmatpush1.msra.mxu0 0.0
    %1100 = vmatprep.subr.mxu0 0.0
    %1101 = vmatpush1.msra.mxu0 0.0
    %1102 = vmatprep.subr.mxu0 0.0
    %1103 = vmatpush1.msra.mxu0 0.0
    %1104 = vmatprep.subr.mxu0 0.0
    %1105 = vmatpush1.msra.mxu0 0.0
    %1106 = vmatprep.subr.mxu0 0.0
    %1107 = vmatpush1.msra.mxu0 0.0
    %1108 = vmatprep.subr.mxu0 0.0
    %1109 = vmatpush1.msra.mxu0 0.0
    %1110 = vmatprep.subr.mxu0 0.0
    %1111 = vmatpush1.msra.mxu0 0.0
    %1112 = vmatprep.subr.mxu0 0.0
    %1113 = vmatpush1.msra.mxu0 0.0
    %1114 = vmatprep.subr.mxu0 0.0
    %1115 = vmatpush1.msra.mxu0 0.0
    %1116 = vmatprep.subr.mxu0 0.0
    %1117 = vmatpush1.msra.mxu0 0.0
    %1118 = vmatprep.mubr.f32.mxu0 0.0
    %1119 = vmatmul.mubr.f32.gmra.mrb[0].mxu0 %v967
    %v1120 = vpop.f32.mrb[0].mxu0
    %v1121 = vadd.f32 %v1037, %v1120
    %v1122 = vpop.f32.mrb[0].mxu0
    %v1123 = vadd.f32 %v1041, %v1122
    %1124 = vdwg.mxu0
    %1125 = vmatprep.subr.mxu0 %v971
    %1126 = vmatpush1.msra.mxu0 %v970
    %1127 = vmatprep.subr.mxu0 %v975
    %1128 = vmatpush1.msra.mxu0 %v974
    %1129 = vmatprep.subr.mxu0 %v979
    %1130 = vmatpush1.msra.mxu0 %v978
    %1131 = vmatprep.subr.mxu0 %v983
    %1132 = vmatpush1.msra.mxu0 %v982
    %1133 = vmatprep.subr.mxu0 %v987
    %1134 = vmatpush1.msra.mxu0 %v986
    %1135 = vmatprep.subr.mxu0 %v991
    %1136 = vmatpush1.msra.mxu0 %v990
    %1137 = vmatprep.subr.mxu0 %v995
    %1138 = vmatpush1.msra.mxu0 %v994
    %1139 = vmatprep.subr.mxu0 %v999
    %1140 = vmatpush1.msra.mxu0 %v998
    %1141 = vmatprep.subr.mxu0 %v1003
    %1142 = vmatpush1.msra.mxu0 %v1002
    %1143 = vmatprep.subr.mxu0 %v1007
    %1144 = vmatpush1.msra.mxu0 %v1006
    %1145 = vmatprep.subr.mxu0 %v1011
    %1146 = vmatpush1.msra.mxu0 %v1010
    %1147 = vmatprep.subr.mxu0 %v1015
    %1148 = vmatpush1.msra.mxu0 %v1014
    %1149 = vmatprep.subr.mxu0 %v1019
    %1150 = vmatpush1.msra.mxu0 %v1018
    %1151 = vmatprep.subr.mxu0 %v1023
    %1152 = vmatpush1.msra.mxu0 %v1022
    %1153 = vmatprep.subr.mxu0 %v1027
    %1154 = vmatpush1.msra.mxu0 %v1026
    %1155 = vmatprep.subr.mxu0 %v1031
    %1156 = vmatpush1.msra.mxu0 %v1030
    %1157 = vmatprep.subr.mxu0 0.0
    %1158 = vmatpush1.msra.mxu0 0.0
    %1159 = vmatprep.subr.mxu0 0.0
    %1160 = vmatpush1.msra.mxu0 0.0
    %1161 = vmatprep.subr.mxu0 0.0
    %1162 = vmatpush1.msra.mxu0 0.0
    %1163 = vmatprep.subr.mxu0 0.0
    %1164 = vmatpush1.msra.mxu0 0.0
    %1165 = vmatprep.subr.mxu0 0.0
    %1166 = vmatpush1.msra.mxu0 0.0
    %1167 = vmatprep.subr.mxu0 0.0
    %1168 = vmatpush1.msra.mxu0 0.0
    %1169 = vmatprep.subr.mxu0 0.0
    %1170 = vmatpush1.msra.mxu0 0.0
    %1171 = vmatprep.subr.mxu0 0.0
    %1172 = vmatpush1.msra.mxu0 0.0
    %1173 = vmatprep.subr.mxu0 0.0
    %1174 = vmatpush1.msra.mxu0 0.0
    %1175 = vmatprep.subr.mxu0 0.0
    %1176 = vmatpush1.msra.mxu0 0.0
    %1177 = vmatprep.subr.mxu0 0.0
    %1178 = vmatpush1.msra.mxu0 0.0
    %1179 = vmatprep.subr.mxu0 0.0
    %1180 = vmatpush1.msra.mxu0 0.0
    %1181 = vmatprep.subr.mxu0 0.0
    %1182 = vmatpush1.msra.mxu0 0.0
    %1183 = vmatprep.subr.mxu0 0.0
    %1184 = vmatpush1.msra.mxu0 0.0
    %1185 = vmatprep.subr.mxu0 0.0
    %1186 = vmatpush1.msra.mxu0 0.0
    %1187 = vmatprep.subr.mxu0 0.0
    %1188 = vmatpush1.msra.mxu0 0.0
    %1189 = vmatprep.mubr.f32.mxu0 0.0
    %1190 = vmatmul.mubr.f32.gmra.mrb[0].mxu0 %v967
    %v1191 = vpop.f32.mrb[0].mxu0
    %v1192 = vadd.f32 %v1045, %v1191
    %v1193 = vpop.f32.mrb[0].mxu0
    %v1194 = vadd.f32 %v1049, %v1193
    %1195 = vdwg.mxu0
    %v1200 = vcombine.low %v1121, %v1123
    %v1201 = vcombine.low %v1192, %v1194
    %v1203 = vunpack.c.l.s4 1983009808
    %v1204 = vunpack.c.0.s8 %v1203
    %v1205 = vlaneseq
    %v1206 = vshrl.u32 %v1205, 7
    %v1207 = vsub.s32 %v1204, %v1206
    %v1208 = vrot.slane %v1200, %v1207
    %v1210 = vunpack.c.l.s4 1983009808
    %v1211 = vunpack.c.0.s8 %v1210
    %v1212 = vlaneseq
    %v1213 = vshrl.u32 %v1212, 7
    %v1214 = vsub.s32 %v1211, %v1213
    %v1215 = vrot.slane %v1201, %v1214
    %v1216 = vcombine.low %v1208, %v1215
    %1218 = vst [vmem:[%s5] sm:$0xff] %v1216
    // Predicated region
    $region34: #{_lambda_.1} parent=1 // pred_check
      _
    $region35: #{_lambda_.1} parent=1 // pred_check_branch
      %1220 = sbr.rel (0) target = $region37
    $region36: #{_lambda_.1} parent=1 // pred_region
      _
    $region37: #{_lambda_.1} parent=1 // pred_fallthru
      _
    // Predicated region
    $region38: #{_lambda_.1} parent=1 // pred_check
      _
    $region39: #{_lambda_.1} parent=1 // pred_check_branch
      %1222 = sbr.rel (0) target = $region41
    $region40: #{_lambda_.1} parent=1 // pred_region
      _
    $region41: #{_lambda_.1} parent=1 // pred_fallthru
      _
    %1223 = vsyncpa [#allocation4], 1
    %1224 = vsyncpa [#allocation6], 1

</llo_original>
